<compile_context>
chip_gen: v5e
topology: v5e:2x2
jax: 0.10.0
libtpu: 0.0.40
codegen_flags: <defaults>
</compile_context>

<pallas_src>
import jax
import jax.numpy as jnp
from jax.experimental import pallas as pl
from jax.experimental.pallas import tpu as pltpu

BLK = 128                       # one lane tile; every logical block fits in it
BN_EPS = 1e-5
NEG_SLOPE = 0.2
ROT_D, DOF_D, TRANS_D = 6, 16, 3
MATMUL_DTYPE = jnp.bfloat16     # MXU input dtype (accumulate in f32)

_VSPEC = pl.BlockSpec(memory_space=pltpu.MemorySpace.VMEM)
_SSPEC = pl.BlockSpec(memory_space=pltpu.MemorySpace.SMEM)

# ----------------------------------------------------------------------------
# Packed-parameter layout (static, shared by init_params and the kernel)
# ----------------------------------------------------------------------------
# Weight slab: groups keyed by the LHS activation that consumes them; members
# are (128,128) pieces stacked along the lane axis so one dot serves them all.
W_GROUPS = (
    ("x0",   ("e1_fc1", "e1_fc3", "e2_fc1a", "e2_fc3a")),
    ("x1",   ("e2_fc1b", "e2_fc3b")),
    ("x2",   ("enc_mu", "enc_var")),
    ("z",    ("d1_fc1a", "d1_fc3a", "d2_fc1a", "d2_fc3a")),
    ("cond", ("d1_fc1b", "d1_fc3b", "d2_fc1b", "d2_fc3b")),
    ("xd1",  ("d2_fc1c", "d2_fc3c")),
    ("xd2",  ("head",)),
    ("h_e1", ("e1_fc2",)),
    ("h_e2", ("e2_fc2",)),
    ("h_d1", ("d1_fc2",)),
    ("h_d2", ("d2_fc2",)),
)

VEC_NAMES = (
    "enc_bn1_g", "enc_bn1_b", "dec_bn1_g", "dec_bn1_b",
    "e1_bn1_g", "e1_bn1_b", "e1_bn2_g", "e1_bn2_b", "e1_b1", "e1_b2", "e1_b3",
    "e2_bn1_g", "e2_bn1_b", "e2_bn2_g", "e2_bn2_b", "e2_b1", "e2_b2", "e2_b3",
    "d1_bn1_g", "d1_bn1_b", "d1_bn2_g", "d1_bn2_b", "d1_b1", "d1_b2", "d1_b3",
    "d2_bn1_g", "d2_bn1_b", "d2_bn2_g", "d2_bn2_b", "d2_b1", "d2_b2", "d2_b3",
    "mu_b", "var_b", "head_b",
)


def _build_w_slices():
    slices, off = {}, 0
    for gname, members in W_GROUPS:
        width = BLK * len(members)
        slices[gname] = (off, width)
        off += width
    return slices, off


_W_SLICE, W_TOTAL_COLS = _build_w_slices()
_VEC_IDX = {name: i for i, name in enumerate(VEC_NAMES)}
VEC_ROWS = ((len(VEC_NAMES) + 7) // 8) * 8


# ----------------------------------------------------------------------------
# In-kernel helpers (pure jnp, traced inside the Pallas body)
# ----------------------------------------------------------------------------
def _leaky(x):
    return jnp.where(x >= 0, x, NEG_SLOPE * x)


def _softplus(x):
    # Matches F.softplus(beta=1, threshold=20).
    return jnp.where(x > 20.0, x, jnp.log1p(jnp.exp(jnp.minimum(x, 20.0))))


# ----------------------------------------------------------------------------
# The single fused kernel
# ----------------------------------------------------------------------------
def _coarse_kernel(n_ref, x_ref, cond_ref, eps_ref, w_ref, vec_ref,
                   enc_out_ref, dec_out_ref):
    def W(group):                           # static lane slice of the weight slab
        off, width = _W_SLICE[group]
        return w_ref[:, off:off + width]

    def V(name):                            # one (1, 128) parameter vector
        i = _VEC_IDX[name]
        return vec_ref[i:i + 1, :]

    def mm(a, group):                       # bf16 MXU matmul, f32 accumulate
        return jnp.dot(a.astype(MATMUL_DTYPE), W(group),
                       preferred_element_type=jnp.float32)

    b_pad = x_ref.shape[0]
    n_real = n_ref[0, 0]
    row = jax.lax.broadcasted_iota(jnp.int32, (b_pad, 1), 0)
    mask = (row < n_real).astype(jnp.float32)
    inv_n = 1.0 / n_real.astype(jnp.float32)

    def bn(xv, g, b):
        # BatchNorm1d (training): batch mean / biased var over real rows only.
        xm = xv * mask
        mean = jnp.sum(xm, axis=0, keepdims=True) * inv_n
        diff = (xv - mean) * mask
        var = jnp.sum(diff * diff, axis=0, keepdims=True) * inv_n
        scale = g * jax.lax.rsqrt(var + BN_EPS)
        shift = b - mean * scale
        return xv * scale + shift

    # ------------------------- encode -------------------------
    x0 = bn(x_ref[...], V("enc_bn1_g"), V("enc_bn1_b"))

    # One wide dot feeds e1.fc1, e1.fc3 and the x0-rows of e2.fc1 / e2.fc3.
    r0 = mm(x0, "x0")                                       # (B, 4*BLK)
    e1_h = r0[:, 0 * BLK:1 * BLK] + V("e1_b1")
    e1_sk = r0[:, 1 * BLK:2 * BLK] + V("e1_b3")
    e2_h_a = r0[:, 2 * BLK:3 * BLK]
    e2_sk_a = r0[:, 3 * BLK:4 * BLK]

    h = _leaky(bn(e1_h, V("e1_bn1_g"), V("e1_bn1_b")))
    h = mm(h, "h_e1") + V("e1_b2")
    h = bn(h, V("e1_bn2_g"), V("e1_bn2_b"))
    x1 = _leaky(_leaky(e1_sk) + h)                          # enc_rb1 output

    r1 = mm(x1, "x1")                                       # x1-rows of e2.fc1/fc3
    e2_h = e2_h_a + r1[:, 0:BLK] + V("e2_b1")
    e2_sk = e2_sk_a + r1[:, BLK:2 * BLK] + V("e2_b3")
    h = _leaky(bn(e2_h, V("e2_bn1_g"), V("e2_bn1_b")))
    h = mm(h, "h_e2") + V("e2_b2")
    h = bn(h, V("e2_bn2_g"), V("e2_bn2_b"))
    x2 = _leaky(_leaky(e2_sk) + h)                          # enc_rb2 output

    r2 = mm(x2, "x2")                                       # fused mu | var
    mu = r2[:, 0:BLK] + V("mu_b")
    raw = r2[:, BLK:2 * BLK] + V("var_b")
    std = _softplus(raw)
    z = mu + std * eps_ref[...]                             # Normal(mu,std).rsample()

    # ------------------------- decode -------------------------
    o_bps = bn(cond_ref[...], V("dec_bn1_g"), V("dec_bn1_b"))

    rz = mm(z, "z")          # z-rows of d1.fc1/fc3 and d2.fc1/fc3
    rc = mm(o_bps, "cond")   # o_bps-rows of d1.fc1/fc3 and d2.fc1/fc3
    d1_h = rz[:, 0:BLK] + rc[:, 0:BLK] + V("d1_b1")
    d1_sk = rz[:, BLK:2 * BLK] + rc[:, BLK:2 * BLK] + V("d1_b3")
    d2_h_a = rz[:, 2 * BLK:3 * BLK] + rc[:, 2 * BLK:3 * BLK]
    d2_sk_a = rz[:, 3 * BLK:4 * BLK] + rc[:, 3 * BLK:4 * BLK]

    h = _leaky(bn(d1_h, V("d1_bn1_g"), V("d1_bn1_b")))
    h = mm(h, "h_d1") + V("d1_b2")
    h = bn(h, V("d1_bn2_g"), V("d1_bn2_b"))
    xd1 = _leaky(_leaky(d1_sk) + h)                         # dec_rb1 output

    r3 = mm(xd1, "xd1")                                     # xd1-rows of d2.fc1/fc3
    d2_h = d2_h_a + r3[:, 0:BLK] + V("d2_b1")
    d2_sk = d2_sk_a + r3[:, BLK:2 * BLK] + V("d2_b3")
    h = _leaky(bn(d2_h, V("d2_bn1_g"), V("d2_bn1_b")))
    h = mm(h, "h_d2") + V("d2_b2")
    h = bn(h, V("d2_bn2_g"), V("d2_bn2_b"))
    xd2 = _leaky(_leaky(d2_sk) + h)                         # dec_rb2 output

    head = mm(xd2, "xd2") + V("head_b")                     # [rot | dof | trans | 0]

    # Single unmasked lane-dense stores.
    enc_out_ref[...] = jnp.concatenate([mu, std, z], axis=1)   # (B, 3*BLK)
    dec_out_ref[...] = head                                    # (B, BLK)


# ----------------------------------------------------------------------------
# Glue: 6D rotation -> rotation matrix (tiny, plain JAX)
# ----------------------------------------------------------------------------
def crot2rotmat(pose6):
    """pose6: (bs, 6) -> (bs, 3, 3). Mirrors grabnet CRot2rotmat."""
    m = pose6.reshape(-1, 3, 2)
    a1 = m[:, :, 0]
    a2 = m[:, :, 1]
    b1 = a1 / jnp.maximum(jnp.linalg.norm(a1, axis=1, keepdims=True), 1e-12)
    dot = jnp.sum(b1 * a2, axis=1, keepdims=True)
    u2 = a2 - dot * b1
    b2 = u2 / jnp.maximum(jnp.linalg.norm(u2, axis=1, keepdims=True), 1e-12)
    b3 = jnp.cross(b1, b2, axis=1)
    return jnp.stack([b1, b2, b3], axis=-1)


# ----------------------------------------------------------------------------
# Parameter construction: deterministic synthetic weights packed into 2 slabs
# ----------------------------------------------------------------------------
def init_params(key, *, in_bps, in_label, in_pose, n_neurons, latentD, rb_hidden):
    d_cond = in_bps + in_label
    d_enc = d_cond + in_pose
    head_d = ROT_D + DOF_D + TRANS_D
    for d in (d_enc, d_cond, n_neurons, rb_hidden, latentD, head_d):
        assert d <= BLK, "packed layout assumes every logical block fits one 128-lane tile"

    keys = iter(jax.random.split(key, 256))

    def wpiece(fin, fout):
        w = 0.05 * jax.random.normal(next(keys), (fin, fout), jnp.float32)
        return jnp.pad(w, ((0, BLK - fin), (0, BLK - fout)))

    def bn_g(n):   # padded lanes MUST be zero so padded features stay zero
        g = 1.0 + 0.1 * jax.random.normal(next(keys), (n,), jnp.float32)
        return jnp.pad(g, (0, BLK - n))

    def bn_b(n):
        b = 0.1 * jax.random.normal(next(keys), (n,), jnp.float32)
        return jnp.pad(b, (0, BLK - n))

    def bias(n):
        b = 0.05 * jax.random.normal(next(keys), (n,), jnp.float32)
        return jnp.pad(b, (0, BLK - n))

    # fc1/fc3 of the concat ResBlocks are stored row-split per input part so the
    # kernel computes dot(concat(parts), W) = sum_i dot(part_i, W_i).
    pieces = {
        "e1_fc1": wpiece(d_enc, rb_hidden),
        "e1_fc3": wpiece(d_enc, n_neurons),
        "e2_fc1a": wpiece(d_enc, rb_hidden),
        "e2_fc3a": wpiece(d_enc, n_neurons),
        "e2_fc1b": wpiece(n_neurons, rb_hidden),
        "e2_fc3b": wpiece(n_neurons, n_neurons),
        "enc_mu": wpiece(n_neurons, latentD),
        "enc_var": wpiece(n_neurons, latentD),
        "d1_fc1a": wpiece(latentD, rb_hidden),
        "d1_fc3a": wpiece(latentD, n_neurons),
        "d2_fc1a": wpiece(latentD, rb_hidden),
        "d2_fc3a": wpiece(latentD, n_neurons),
        "d1_fc1b": wpiece(d_cond, rb_hidden),
        "d1_fc3b": wpiece(d_cond, n_neurons),
        "d2_fc1b": wpiece(d_cond, rb_hidden),
        "d2_fc3b": wpiece(d_cond, n_neurons),
        "d2_fc1c": wpiece(n_neurons, rb_hidden),
        "d2_fc3c": wpiece(n_neurons, n_neurons),
        "e1_fc2": wpiece(rb_hidden, n_neurons),
        "e2_fc2": wpiece(rb_hidden, n_neurons),
        "d1_fc2": wpiece(rb_hidden, n_neurons),
        "d2_fc2": wpiece(rb_hidden, n_neurons),
    }
    # Fused decoder heads (rot | dof | trans) in one (n_neurons, 25) weight.
    head_w = jnp.concatenate(
        [0.05 * jax.random.normal(next(keys), (n_neurons, ROT_D), jnp.float32),
         0.05 * jax.random.normal(next(keys), (n_neurons, DOF_D), jnp.float32),
         0.05 * jax.random.normal(next(keys), (n_neurons, TRANS_D), jnp.float32)],
        axis=1)
    pieces["head"] = jnp.pad(head_w, ((0, BLK - n_neurons), (0, BLK - head_d)))

    cols = []
    for _, members in W_GROUPS:
        for m in members:
            cols.append(pieces[m])
    w_slab = jnp.concatenate(cols, axis=1).astype(MATMUL_DTYPE)
    assert w_slab.shape == (BLK, W_TOTAL_COLS)

    vecs = {
        "enc_bn1_g": bn_g(d_enc), "enc_bn1_b": bn_b(d_enc),
        "dec_bn1_g": bn_g(d_cond), "dec_bn1_b": bn_b(d_cond),
        "mu_b": bias(latentD), "var_b": bias(latentD), "head_b": bias(head_d),
    }
    for pfx in ("e1", "e2", "d1", "d2"):
        vecs[pfx + "_bn1_g"] = bn_g(rb_hidden)
        vecs[pfx + "_bn1_b"] = bn_b(rb_hidden)
        vecs[pfx + "_bn2_g"] = bn_g(n_neurons)
        vecs[pfx + "_bn2_b"] = bn_b(n_neurons)
        vecs[pfx + "_b1"] = bias(rb_hidden)
        vecs[pfx + "_b2"] = bias(n_neurons)
        vecs[pfx + "_b3"] = bias(n_neurons)

    vec_slab = jnp.stack([vecs[n] for n in VEC_NAMES], axis=0)
    vec_slab = jnp.pad(vec_slab, ((0, VEC_ROWS - len(VEC_NAMES)), (0, 0)))

    return {"w_slab": w_slab, "vec_slab": vec_slab.astype(jnp.float32)}


# ----------------------------------------------------------------------------
# CoarseNet forward (one fused pallas_call + cheap JAX glue)
# ----------------------------------------------------------------------------
def coarse_net_forward(params, bps_object, afford_label, trans_rhand,
                       global_orient_rhand_rotmat, eps):
    bs = bps_object.shape[0]
    latent_d = eps.shape[1]

    # Raw-input concats (one-time, tiny) stay in JAX; intermediate concats are
    # eliminated via split weights inside the kernel.
    x_enc = jnp.concatenate(
        [bps_object, afford_label,
         global_orient_rhand_rotmat.reshape(bs, -1), trans_rhand], axis=1)
    cond = jnp.concatenate([bps_object, afford_label], axis=1)

    # Pad batch to a sublane multiple and features to one 128-lane tile.
    b_pad = max(8, ((bs + 7) // 8) * 8)

    def pad2(a):
        return jnp.pad(a, ((0, b_pad - a.shape[0]), (0, BLK - a.shape[1])))

    x_p, c_p, e_p = pad2(x_enc), pad2(cond), pad2(eps)
    n_valid = jnp.full((1, 1), bs, jnp.int32)   # SMEM scalar: real batch size

    enc_out, dec_out = pl.pallas_call(
        _coarse_kernel,
        out_shape=(jax.ShapeDtypeStruct((b_pad, 3 * BLK), jnp.float32),   # mu|std|z
                   jax.ShapeDtypeStruct((b_pad, BLK), jnp.float32)),      # rot|dof|trans
        in_specs=[_SSPEC,                    # n_valid
                  _VSPEC, _VSPEC, _VSPEC,    # x_enc, cond, eps
                  _VSPEC, _VSPEC],           # packed weight slab, packed vec slab
        out_specs=(_VSPEC, _VSPEC),
    )(n_valid, x_p, c_p, e_p, params["w_slab"], params["vec_slab"])

    # Logical slicing back to module outputs (drop batch/lane padding).
    mu = enc_out[:bs, 0:latent_d]
    std = enc_out[:bs, BLK:BLK + latent_d]
    z = enc_out[:bs, 2 * BLK:2 * BLK + latent_d]
    global_pose = dec_out[:bs, 0:ROT_D]
    dofs = dec_out[:bs, ROT_D:ROT_D + DOF_D]
    trans = dec_out[:bs, ROT_D + DOF_D:ROT_D + DOF_D + TRANS_D]

    # ----- parms_decode -----
    global_orient = crot2rotmat(global_pose)                 # (bs, 3, 3)
    # TODO(synk): rotmat2aa(global_pose) is computed in the PyTorch reference but
    # never returned by parms_decode, so it is intentionally skipped here.
    root_trans = jnp.concatenate(
        [global_orient, trans.reshape(bs, 3, 1)], axis=2)    # (bs, 3, 4)

    return {
        "mean": mu,
        "std": std,
        "root_trans": root_trans,
        "dofs": dofs,
        "trans": trans,
        "global_orient": global_orient,
        "z": z,
    }


# ----------------------------------------------------------------------------
# Main
# ----------------------------------------------------------------------------
if __name__ == "__main__":
    # Small synthetic shapes consistent with the module's interface.
    BS = 4
    IN_BPS = 64
    IN_LABEL = 10
    IN_POSE = 12          # 9 (flattened 3x3 rotmat) + 3 (translation)
    N_NEURONS = 64
    LATENT_D = 8
    RB_HIDDEN = 32        # ResBlock internal hidden (PyTorch default is 256)

    root = jax.random.PRNGKey(0)
    k_params, k_bps, k_lbl, k_trans, k_rot, k_eps = jax.random.split(root, 6)

    params = init_params(
        k_params, in_bps=IN_BPS, in_label=IN_LABEL, in_pose=IN_POSE,
        n_neurons=N_NEURONS, latentD=LATENT_D, rb_hidden=RB_HIDDEN)

    bps_object = jax.random.normal(k_bps, (BS, IN_BPS), jnp.float32)
    afford_label = jax.random.normal(k_lbl, (BS, IN_LABEL), jnp.float32)
    trans_rhand = jax.random.normal(k_trans, (BS, 3), jnp.float32)
    global_orient_rhand_rotmat = jax.random.normal(k_rot, (BS, 3, 3), jnp.float32)
    eps = jax.random.normal(k_eps, (BS, LATENT_D), jnp.float32)  # rsample noise

    fwd = jax.jit(coarse_net_forward)
    out = fwd(params, bps_object, afford_label, trans_rhand,
              global_orient_rhand_rotmat, eps)
    jax.block_until_ready(out)

    # Light sanity checks on shapes/dtypes.
    assert out["mean"].shape == (BS, LATENT_D)
    assert out["std"].shape == (BS, LATENT_D)
    assert out["z"].shape == (BS, LATENT_D)
    assert out["root_trans"].shape == (BS, 3, 4)
    assert out["global_orient"].shape == (BS, 3, 3)
    assert out["dofs"].shape == (BS, 16)
    assert out["trans"].shape == (BS, 3)
    assert all(jnp.all(jnp.isfinite(v)) for v in jax.tree_util.tree_leaves(out))
    assert bool(jnp.all(out["std"] > 0.0))

    print("KERNEL_OK")
</pallas_src>

<mosaic_0001>
module attributes {stable_mosaic.version = 11 : i64} {
  func.func @_coarse_kernel(%arg0: memref<1x1xi32, #tpu.memory_space<smem>>, %arg1: memref<8x128xf32, #tpu.memory_space<vmem>>, %arg2: memref<8x128xf32, #tpu.memory_space<vmem>>, %arg3: memref<8x128xf32, #tpu.memory_space<vmem>>, %arg4: memref<128x2944xbf16, #tpu.memory_space<vmem>>, %arg5: memref<40x128xf32, #tpu.memory_space<vmem>>, %arg6: memref<8x384xf32, #tpu.memory_space<vmem>>, %arg7: memref<8x128xf32, #tpu.memory_space<vmem>>) attributes {dimension_semantics = [], scalar_prefetch = 0 : i64, scratch_operands = 0 : i64, tpu.core_type = #tpu.core_type<tc>} {
    %c0 = arith.constant 0 : index
    %c0_0 = arith.constant 0 : index
    %0 = memref.load %arg0[%c0, %c0_0] : memref<1x1xi32, #tpu.memory_space<smem>>
    %1 = tpu.iota {dimensions = array<i32: 0>} : vector<8x1xi32>
    %2 = vector.broadcast %0 : i32 to vector<8x1xi32>
    %3 = arith.cmpi slt, %1, %2 : vector<8x1xi32>
    %4 = arith.extui %3 : vector<8x1xi1> to vector<8x1xi32>
    %5 = arith.sitofp %4 : vector<8x1xi32> to vector<8x1xf32>
    %6 = arith.sitofp %0 : i32 to f32
    %cst = arith.constant 1.000000e+00 : f32
    %7 = arith.divf %cst, %6 : f32
    %c0_1 = arith.constant 0 : index
    %c0_2 = arith.constant 0 : index
    %8 = vector.load %arg1[%c0_1, %c0_2] : memref<8x128xf32, #tpu.memory_space<vmem>>, vector<8x128xf32>
    %c0_3 = arith.constant 0 : index
    %c0_4 = arith.constant 0 : index
    %9 = vector.load %arg5[%c0_3, %c0_4] : memref<40x128xf32, #tpu.memory_space<vmem>>, vector<1x128xf32>
    %c1 = arith.constant 1 : index
    %c0_5 = arith.constant 0 : index
    %10 = vector.load %arg5[%c1, %c0_5] : memref<40x128xf32, #tpu.memory_space<vmem>>, vector<1x128xf32>
    %11 = vector.broadcast %5 : vector<8x1xf32> to vector<8x128xf32>
    %12 = arith.mulf %8, %11 : vector<8x128xf32>
    %cst_6 = arith.constant dense<0.000000e+00> : vector<128xf32>
    %13 = vector.multi_reduction <add>, %12, %cst_6 [0] : vector<8x128xf32> to vector<128xf32>
    %14 = vector.shape_cast %13 : vector<128xf32> to vector<1x128xf32>
    %15 = vector.broadcast %7 : f32 to vector<1x128xf32>
    %16 = arith.mulf %14, %15 : vector<1x128xf32>
    %17 = vector.broadcast %16 : vector<1x128xf32> to vector<8x128xf32>
    %18 = arith.subf %8, %17 : vector<8x128xf32>
    %19 = vector.broadcast %5 : vector<8x1xf32> to vector<8x128xf32>
    %20 = arith.mulf %18, %19 : vector<8x128xf32>
    %21 = arith.mulf %20, %20 : vector<8x128xf32>
    %cst_7 = arith.constant dense<0.000000e+00> : vector<128xf32>
    %22 = vector.multi_reduction <add>, %21, %cst_7 [0] : vector<8x128xf32> to vector<128xf32>
    %23 = vector.shape_cast %22 : vector<128xf32> to vector<1x128xf32>
    %24 = vector.broadcast %7 : f32 to vector<1x128xf32>
    %25 = arith.mulf %23, %24 : vector<1x128xf32>
    %cst_8 = arith.constant 9.99999974E-6 : f32
    %26 = vector.broadcast %cst_8 : f32 to vector<1x128xf32>
    %27 = arith.addf %25, %26 : vector<1x128xf32>
    %28 = math.rsqrt %27 : vector<1x128xf32>
    %29 = arith.mulf %9, %28 : vector<1x128xf32>
    %30 = arith.mulf %16, %29 : vector<1x128xf32>
    %31 = arith.subf %10, %30 : vector<1x128xf32>
    %32 = vector.broadcast %29 : vector<1x128xf32> to vector<8x128xf32>
    %33 = arith.mulf %8, %32 : vector<8x128xf32>
    %34 = vector.broadcast %31 : vector<1x128xf32> to vector<8x128xf32>
    %35 = arith.addf %33, %34 : vector<8x128xf32>
    %36 = arith.truncf %35 : vector<8x128xf32> to vector<8x128xbf16>
    %c0_9 = arith.constant 0 : index
    %c0_10 = arith.constant 0 : index
    %37 = vector.load %arg4[%c0_9, %c0_10] : memref<128x2944xbf16, #tpu.memory_space<vmem>>, vector<128x512xbf16>
    %cst_11 = arith.constant dense<0.000000e+00> : vector<8x512xf32>
    %38 = tpu.matmul %36, %37, %cst_11 {dimension_numbers = #tpu.dot_dimension_numbers<[1], [0], [0], [1], [0, 0, 1, 1], [], []>} : vector<8x128xbf16>, vector<128x512xbf16>, vector<8x512xf32> -> vector<8x512xf32>
    %39 = vector.extract_strided_slice %38 {offsets = [0, 0], sizes = [8, 128], strides = [1, 1]} : vector<8x512xf32> to vector<8x128xf32>
    %c8 = arith.constant 8 : index
    %c0_12 = arith.constant 0 : index
    %40 = vector.load %arg5[%c8, %c0_12] : memref<40x128xf32, #tpu.memory_space<vmem>>, vector<1x128xf32>
    %41 = vector.broadcast %40 : vector<1x128xf32> to vector<8x128xf32>
    %42 = arith.addf %39, %41 : vector<8x128xf32>
    %43 = vector.extract_strided_slice %38 {offsets = [0, 128], sizes = [8, 128], strides = [1, 1]} : vector<8x512xf32> to vector<8x128xf32>
    %c10 = arith.constant 10 : index
    %c0_13 = arith.constant 0 : index
    %44 = vector.load %arg5[%c10, %c0_13] : memref<40x128xf32, #tpu.memory_space<vmem>>, vector<1x128xf32>
    %45 = vector.broadcast %44 : vector<1x128xf32> to vector<8x128xf32>
    %46 = arith.addf %43, %45 : vector<8x128xf32>
    %47 = vector.extract_strided_slice %38 {offsets = [0, 256], sizes = [8, 128], strides = [1, 1]} : vector<8x512xf32> to vector<8x128xf32>
    %48 = vector.extract_strided_slice %38 {offsets = [0, 384], sizes = [8, 128], strides = [1, 1]} : vector<8x512xf32> to vector<8x128xf32>
    %c4 = arith.constant 4 : index
    %c0_14 = arith.constant 0 : index
    %49 = vector.load %arg5[%c4, %c0_14] : memref<40x128xf32, #tpu.memory_space<vmem>>, vector<1x128xf32>
    %c5 = arith.constant 5 : index
    %c0_15 = arith.constant 0 : index
    %50 = vector.load %arg5[%c5, %c0_15] : memref<40x128xf32, #tpu.memory_space<vmem>>, vector<1x128xf32>
    %51 = vector.broadcast %5 : vector<8x1xf32> to vector<8x128xf32>
    %52 = arith.mulf %42, %51 : vector<8x128xf32>
    %cst_16 = arith.constant dense<0.000000e+00> : vector<128xf32>
    %53 = vector.multi_reduction <add>, %52, %cst_16 [0] : vector<8x128xf32> to vector<128xf32>
    %54 = vector.shape_cast %53 : vector<128xf32> to vector<1x128xf32>
    %55 = vector.broadcast %7 : f32 to vector<1x128xf32>
    %56 = arith.mulf %54, %55 : vector<1x128xf32>
    %57 = vector.broadcast %56 : vector<1x128xf32> to vector<8x128xf32>
    %58 = arith.subf %42, %57 : vector<8x128xf32>
    %59 = vector.broadcast %5 : vector<8x1xf32> to vector<8x128xf32>
    %60 = arith.mulf %58, %59 : vector<8x128xf32>
    %61 = arith.mulf %60, %60 : vector<8x128xf32>
    %cst_17 = arith.constant dense<0.000000e+00> : vector<128xf32>
    %62 = vector.multi_reduction <add>, %61, %cst_17 [0] : vector<8x128xf32> to vector<128xf32>
    %63 = vector.shape_cast %62 : vector<128xf32> to vector<1x128xf32>
    %64 = vector.broadcast %7 : f32 to vector<1x128xf32>
    %65 = arith.mulf %63, %64 : vector<1x128xf32>
    %cst_18 = arith.constant 9.99999974E-6 : f32
    %66 = vector.broadcast %cst_18 : f32 to vector<1x128xf32>
    %67 = arith.addf %65, %66 : vector<1x128xf32>
    %68 = math.rsqrt %67 : vector<1x128xf32>
    %69 = arith.mulf %49, %68 : vector<1x128xf32>
    %70 = arith.mulf %56, %69 : vector<1x128xf32>
    %71 = arith.subf %50, %70 : vector<1x128xf32>
    %72 = vector.broadcast %69 : vector<1x128xf32> to vector<8x128xf32>
    %73 = arith.mulf %42, %72 : vector<8x128xf32>
    %74 = vector.broadcast %71 : vector<1x128xf32> to vector<8x128xf32>
    %75 = arith.addf %73, %74 : vector<8x128xf32>
    %cst_19 = arith.constant 0.000000e+00 : f32
    %76 = vector.broadcast %cst_19 : f32 to vector<8x128xf32>
    %77 = arith.cmpf oge, %75, %76 : vector<8x128xf32>
    %cst_20 = arith.constant 2.000000e-01 : f32
    %78 = vector.broadcast %cst_20 : f32 to vector<8x128xf32>
    %79 = arith.mulf %78, %75 : vector<8x128xf32>
    %80 = arith.select %77, %75, %79 : vector<8x128xi1>, vector<8x128xf32>
    %81 = arith.truncf %80 : vector<8x128xf32> to vector<8x128xbf16>
    %c0_21 = arith.constant 0 : index
    %c2432 = arith.constant 2432 : index
    %82 = vector.load %arg4[%c0_21, %c2432] : memref<128x2944xbf16, #tpu.memory_space<vmem>>, vector<128x128xbf16>
    %cst_22 = arith.constant dense<0.000000e+00> : vector<8x128xf32>
    %83 = tpu.matmul %81, %82, %cst_22 {dimension_numbers = #tpu.dot_dimension_numbers<[1], [0], [0], [1], [0, 0, 1, 1], [], []>} : vector<8x128xbf16>, vector<128x128xbf16>, vector<8x128xf32> -> vector<8x128xf32>
    %c9 = arith.constant 9 : index
    %c0_23 = arith.constant 0 : index
    %84 = vector.load %arg5[%c9, %c0_23] : memref<40x128xf32, #tpu.memory_space<vmem>>, vector<1x128xf32>
    %85 = vector.broadcast %84 : vector<1x128xf32> to vector<8x128xf32>
    %86 = arith.addf %83, %85 : vector<8x128xf32>
    %c6 = arith.constant 6 : index
    %c0_24 = arith.constant 0 : index
    %87 = vector.load %arg5[%c6, %c0_24] : memref<40x128xf32, #tpu.memory_space<vmem>>, vector<1x128xf32>
    %c7 = arith.constant 7 : index
    %c0_25 = arith.constant 0 : index
    %88 = vector.load %arg5[%c7, %c0_25] : memref<40x128xf32, #tpu.memory_space<vmem>>, vector<1x128xf32>
    %89 = vector.broadcast %5 : vector<8x1xf32> to vector<8x128xf32>
    %90 = arith.mulf %86, %89 : vector<8x128xf32>
    %cst_26 = arith.constant dense<0.000000e+00> : vector<128xf32>
    %91 = vector.multi_reduction <add>, %90, %cst_26 [0] : vector<8x128xf32> to vector<128xf32>
    %92 = vector.shape_cast %91 : vector<128xf32> to vector<1x128xf32>
    %93 = vector.broadcast %7 : f32 to vector<1x128xf32>
    %94 = arith.mulf %92, %93 : vector<1x128xf32>
    %95 = vector.broadcast %94 : vector<1x128xf32> to vector<8x128xf32>
    %96 = arith.subf %86, %95 : vector<8x128xf32>
    %97 = vector.broadcast %5 : vector<8x1xf32> to vector<8x128xf32>
    %98 = arith.mulf %96, %97 : vector<8x128xf32>
    %99 = arith.mulf %98, %98 : vector<8x128xf32>
    %cst_27 = arith.constant dense<0.000000e+00> : vector<128xf32>
    %100 = vector.multi_reduction <add>, %99, %cst_27 [0] : vector<8x128xf32> to vector<128xf32>
    %101 = vector.shape_cast %100 : vector<128xf32> to vector<1x128xf32>
    %102 = vector.broadcast %7 : f32 to vector<1x128xf32>
    %103 = arith.mulf %101, %102 : vector<1x128xf32>
    %cst_28 = arith.constant 9.99999974E-6 : f32
    %104 = vector.broadcast %cst_28 : f32 to vector<1x128xf32>
    %105 = arith.addf %103, %104 : vector<1x128xf32>
    %106 = math.rsqrt %105 : vector<1x128xf32>
    %107 = arith.mulf %87, %106 : vector<1x128xf32>
    %108 = arith.mulf %94, %107 : vector<1x128xf32>
    %109 = arith.subf %88, %108 : vector<1x128xf32>
    %110 = vector.broadcast %107 : vector<1x128xf32> to vector<8x128xf32>
    %111 = arith.mulf %86, %110 : vector<8x128xf32>
    %112 = vector.broadcast %109 : vector<1x128xf32> to vector<8x128xf32>
    %113 = arith.addf %111, %112 : vector<8x128xf32>
    %cst_29 = arith.constant 0.000000e+00 : f32
    %114 = vector.broadcast %cst_29 : f32 to vector<8x128xf32>
    %115 = arith.cmpf oge, %46, %114 : vector<8x128xf32>
    %cst_30 = arith.constant 2.000000e-01 : f32
    %116 = vector.broadcast %cst_30 : f32 to vector<8x128xf32>
    %117 = arith.mulf %116, %46 : vector<8x128xf32>
    %118 = arith.select %115, %46, %117 : vector<8x128xi1>, vector<8x128xf32>
    %119 = arith.addf %118, %113 : vector<8x128xf32>
    %cst_31 = arith.constant 0.000000e+00 : f32
    %120 = vector.broadcast %cst_31 : f32 to vector<8x128xf32>
    %121 = arith.cmpf oge, %119, %120 : vector<8x128xf32>
    %cst_32 = arith.constant 2.000000e-01 : f32
    %122 = vector.broadcast %cst_32 : f32 to vector<8x128xf32>
    %123 = arith.mulf %122, %119 : vector<8x128xf32>
    %124 = arith.select %121, %119, %123 : vector<8x128xi1>, vector<8x128xf32>
    %125 = arith.truncf %124 : vector<8x128xf32> to vector<8x128xbf16>
    %c0_33 = arith.constant 0 : index
    %c512 = arith.constant 512 : index
    %126 = vector.load %arg4[%c0_33, %c512] : memref<128x2944xbf16, #tpu.memory_space<vmem>>, vector<128x256xbf16>
    %cst_34 = arith.constant dense<0.000000e+00> : vector<8x256xf32>
    %127 = tpu.matmul %125, %126, %cst_34 {dimension_numbers = #tpu.dot_dimension_numbers<[1], [0], [0], [1], [0, 0, 1, 1], [], []>} : vector<8x128xbf16>, vector<128x256xbf16>, vector<8x256xf32> -> vector<8x256xf32>
    %128 = vector.extract_strided_slice %127 {offsets = [0, 0], sizes = [8, 128], strides = [1, 1]} : vector<8x256xf32> to vector<8x128xf32>
    %129 = arith.addf %47, %128 : vector<8x128xf32>
    %c15 = arith.constant 15 : index
    %c0_35 = arith.constant 0 : index
    %130 = vector.load %arg5[%c15, %c0_35] : memref<40x128xf32, #tpu.memory_space<vmem>>, vector<1x128xf32>
    %131 = vector.broadcast %130 : vector<1x128xf32> to vector<8x128xf32>
    %132 = arith.addf %129, %131 : vector<8x128xf32>
    %133 = vector.extract_strided_slice %127 {offsets = [0, 128], sizes = [8, 128], strides = [1, 1]} : vector<8x256xf32> to vector<8x128xf32>
    %134 = arith.addf %48, %133 : vector<8x128xf32>
    %c17 = arith.constant 17 : index
    %c0_36 = arith.constant 0 : index
    %135 = vector.load %arg5[%c17, %c0_36] : memref<40x128xf32, #tpu.memory_space<vmem>>, vector<1x128xf32>
    %136 = vector.broadcast %135 : vector<1x128xf32> to vector<8x128xf32>
    %137 = arith.addf %134, %136 : vector<8x128xf32>
    %c11 = arith.constant 11 : index
    %c0_37 = arith.constant 0 : index
    %138 = vector.load %arg5[%c11, %c0_37] : memref<40x128xf32, #tpu.memory_space<vmem>>, vector<1x128xf32>
    %c12 = arith.constant 12 : index
    %c0_38 = arith.constant 0 : index
    %139 = vector.load %arg5[%c12, %c0_38] : memref<40x128xf32, #tpu.memory_space<vmem>>, vector<1x128xf32>
    %140 = vector.broadcast %5 : vector<8x1xf32> to vector<8x128xf32>
    %141 = arith.mulf %132, %140 : vector<8x128xf32>
    %cst_39 = arith.constant dense<0.000000e+00> : vector<128xf32>
    %142 = vector.multi_reduction <add>, %141, %cst_39 [0] : vector<8x128xf32> to vector<128xf32>
    %143 = vector.shape_cast %142 : vector<128xf32> to vector<1x128xf32>
    %144 = vector.broadcast %7 : f32 to vector<1x128xf32>
    %145 = arith.mulf %143, %144 : vector<1x128xf32>
    %146 = vector.broadcast %145 : vector<1x128xf32> to vector<8x128xf32>
    %147 = arith.subf %132, %146 : vector<8x128xf32>
    %148 = vector.broadcast %5 : vector<8x1xf32> to vector<8x128xf32>
    %149 = arith.mulf %147, %148 : vector<8x128xf32>
    %150 = arith.mulf %149, %149 : vector<8x128xf32>
    %cst_40 = arith.constant dense<0.000000e+00> : vector<128xf32>
    %151 = vector.multi_reduction <add>, %150, %cst_40 [0] : vector<8x128xf32> to vector<128xf32>
    %152 = vector.shape_cast %151 : vector<128xf32> to vector<1x128xf32>
    %153 = vector.broadcast %7 : f32 to vector<1x128xf32>
    %154 = arith.mulf %152, %153 : vector<1x128xf32>
    %cst_41 = arith.constant 9.99999974E-6 : f32
    %155 = vector.broadcast %cst_41 : f32 to vector<1x128xf32>
    %156 = arith.addf %154, %155 : vector<1x128xf32>
    %157 = math.rsqrt %156 : vector<1x128xf32>
    %158 = arith.mulf %138, %157 : vector<1x128xf32>
    %159 = arith.mulf %145, %158 : vector<1x128xf32>
    %160 = arith.subf %139, %159 : vector<1x128xf32>
    %161 = vector.broadcast %158 : vector<1x128xf32> to vector<8x128xf32>
    %162 = arith.mulf %132, %161 : vector<8x128xf32>
    %163 = vector.broadcast %160 : vector<1x128xf32> to vector<8x128xf32>
    %164 = arith.addf %162, %163 : vector<8x128xf32>
    %cst_42 = arith.constant 0.000000e+00 : f32
    %165 = vector.broadcast %cst_42 : f32 to vector<8x128xf32>
    %166 = arith.cmpf oge, %164, %165 : vector<8x128xf32>
    %cst_43 = arith.constant 2.000000e-01 : f32
    %167 = vector.broadcast %cst_43 : f32 to vector<8x128xf32>
    %168 = arith.mulf %167, %164 : vector<8x128xf32>
    %169 = arith.select %166, %164, %168 : vector<8x128xi1>, vector<8x128xf32>
    %170 = arith.truncf %169 : vector<8x128xf32> to vector<8x128xbf16>
    %c0_44 = arith.constant 0 : index
    %c2560 = arith.constant 2560 : index
    %171 = vector.load %arg4[%c0_44, %c2560] : memref<128x2944xbf16, #tpu.memory_space<vmem>>, vector<128x128xbf16>
    %cst_45 = arith.constant dense<0.000000e+00> : vector<8x128xf32>
    %172 = tpu.matmul %170, %171, %cst_45 {dimension_numbers = #tpu.dot_dimension_numbers<[1], [0], [0], [1], [0, 0, 1, 1], [], []>} : vector<8x128xbf16>, vector<128x128xbf16>, vector<8x128xf32> -> vector<8x128xf32>
    %c16 = arith.constant 16 : index
    %c0_46 = arith.constant 0 : index
    %173 = vector.load %arg5[%c16, %c0_46] : memref<40x128xf32, #tpu.memory_space<vmem>>, vector<1x128xf32>
    %174 = vector.broadcast %173 : vector<1x128xf32> to vector<8x128xf32>
    %175 = arith.addf %172, %174 : vector<8x128xf32>
    %c13 = arith.constant 13 : index
    %c0_47 = arith.constant 0 : index
    %176 = vector.load %arg5[%c13, %c0_47] : memref<40x128xf32, #tpu.memory_space<vmem>>, vector<1x128xf32>
    %c14 = arith.constant 14 : index
    %c0_48 = arith.constant 0 : index
    %177 = vector.load %arg5[%c14, %c0_48] : memref<40x128xf32, #tpu.memory_space<vmem>>, vector<1x128xf32>
    %178 = vector.broadcast %5 : vector<8x1xf32> to vector<8x128xf32>
    %179 = arith.mulf %175, %178 : vector<8x128xf32>
    %cst_49 = arith.constant dense<0.000000e+00> : vector<128xf32>
    %180 = vector.multi_reduction <add>, %179, %cst_49 [0] : vector<8x128xf32> to vector<128xf32>
    %181 = vector.shape_cast %180 : vector<128xf32> to vector<1x128xf32>
    %182 = vector.broadcast %7 : f32 to vector<1x128xf32>
    %183 = arith.mulf %181, %182 : vector<1x128xf32>
    %184 = vector.broadcast %183 : vector<1x128xf32> to vector<8x128xf32>
    %185 = arith.subf %175, %184 : vector<8x128xf32>
    %186 = vector.broadcast %5 : vector<8x1xf32> to vector<8x128xf32>
    %187 = arith.mulf %185, %186 : vector<8x128xf32>
    %188 = arith.mulf %187, %187 : vector<8x128xf32>
    %cst_50 = arith.constant dense<0.000000e+00> : vector<128xf32>
    %189 = vector.multi_reduction <add>, %188, %cst_50 [0] : vector<8x128xf32> to vector<128xf32>
    %190 = vector.shape_cast %189 : vector<128xf32> to vector<1x128xf32>
    %191 = vector.broadcast %7 : f32 to vector<1x128xf32>
    %192 = arith.mulf %190, %191 : vector<1x128xf32>
    %cst_51 = arith.constant 9.99999974E-6 : f32
    %193 = vector.broadcast %cst_51 : f32 to vector<1x128xf32>
    %194 = arith.addf %192, %193 : vector<1x128xf32>
    %195 = math.rsqrt %194 : vector<1x128xf32>
    %196 = arith.mulf %176, %195 : vector<1x128xf32>
    %197 = arith.mulf %183, %196 : vector<1x128xf32>
    %198 = arith.subf %177, %197 : vector<1x128xf32>
    %199 = vector.broadcast %196 : vector<1x128xf32> to vector<8x128xf32>
    %200 = arith.mulf %175, %199 : vector<8x128xf32>
    %201 = vector.broadcast %198 : vector<1x128xf32> to vector<8x128xf32>
    %202 = arith.addf %200, %201 : vector<8x128xf32>
    %cst_52 = arith.constant 0.000000e+00 : f32
    %203 = vector.broadcast %cst_52 : f32 to vector<8x128xf32>
    %204 = arith.cmpf oge, %137, %203 : vector<8x128xf32>
    %cst_53 = arith.constant 2.000000e-01 : f32
    %205 = vector.broadcast %cst_53 : f32 to vector<8x128xf32>
    %206 = arith.mulf %205, %137 : vector<8x128xf32>
    %207 = arith.select %204, %137, %206 : vector<8x128xi1>, vector<8x128xf32>
    %208 = arith.addf %207, %202 : vector<8x128xf32>
    %cst_54 = arith.constant 0.000000e+00 : f32
    %209 = vector.broadcast %cst_54 : f32 to vector<8x128xf32>
    %210 = arith.cmpf oge, %208, %209 : vector<8x128xf32>
    %cst_55 = arith.constant 2.000000e-01 : f32
    %211 = vector.broadcast %cst_55 : f32 to vector<8x128xf32>
    %212 = arith.mulf %211, %208 : vector<8x128xf32>
    %213 = arith.select %210, %208, %212 : vector<8x128xi1>, vector<8x128xf32>
    %214 = arith.truncf %213 : vector<8x128xf32> to vector<8x128xbf16>
    %c0_56 = arith.constant 0 : index
    %c768 = arith.constant 768 : index
    %215 = vector.load %arg4[%c0_56, %c768] : memref<128x2944xbf16, #tpu.memory_space<vmem>>, vector<128x256xbf16>
    %cst_57 = arith.constant dense<0.000000e+00> : vector<8x256xf32>
    %216 = tpu.matmul %214, %215, %cst_57 {dimension_numbers = #tpu.dot_dimension_numbers<[1], [0], [0], [1], [0, 0, 1, 1], [], []>} : vector<8x128xbf16>, vector<128x256xbf16>, vector<8x256xf32> -> vector<8x256xf32>
    %217 = vector.extract_strided_slice %216 {offsets = [0, 0], sizes = [8, 128], strides = [1, 1]} : vector<8x256xf32> to vector<8x128xf32>
    %c32 = arith.constant 32 : index
    %c0_58 = arith.constant 0 : index
    %218 = vector.load %arg5[%c32, %c0_58] : memref<40x128xf32, #tpu.memory_space<vmem>>, vector<1x128xf32>
    %219 = vector.broadcast %218 : vector<1x128xf32> to vector<8x128xf32>
    %220 = arith.addf %217, %219 : vector<8x128xf32>
    %221 = vector.extract_strided_slice %216 {offsets = [0, 128], sizes = [8, 128], strides = [1, 1]} : vector<8x256xf32> to vector<8x128xf32>
    %c33 = arith.constant 33 : index
    %c0_59 = arith.constant 0 : index
    %222 = vector.load %arg5[%c33, %c0_59] : memref<40x128xf32, #tpu.memory_space<vmem>>, vector<1x128xf32>
    %223 = vector.broadcast %222 : vector<1x128xf32> to vector<8x128xf32>
    %224 = arith.addf %221, %223 : vector<8x128xf32>
    %cst_60 = arith.constant 2.000000e+01 : f32
    %225 = vector.broadcast %cst_60 : f32 to vector<8x128xf32>
    %226 = arith.cmpf ogt, %224, %225 : vector<8x128xf32>
    %cst_61 = arith.constant 2.000000e+01 : f32
    %227 = vector.broadcast %cst_61 : f32 to vector<8x128xf32>
    %228 = arith.minimumf %224, %227 : vector<8x128xf32>
    %229 = math.exp %228 : vector<8x128xf32>
    %230 = math.log1p %229 : vector<8x128xf32>
    %231 = arith.select %226, %224, %230 : vector<8x128xi1>, vector<8x128xf32>
    %c0_62 = arith.constant 0 : index
    %c0_63 = arith.constant 0 : index
    %232 = vector.load %arg3[%c0_62, %c0_63] : memref<8x128xf32, #tpu.memory_space<vmem>>, vector<8x128xf32>
    %233 = arith.mulf %231, %232 : vector<8x128xf32>
    %234 = arith.addf %220, %233 : vector<8x128xf32>
    %c0_64 = arith.constant 0 : index
    %c0_65 = arith.constant 0 : index
    %235 = vector.load %arg2[%c0_64, %c0_65] : memref<8x128xf32, #tpu.memory_space<vmem>>, vector<8x128xf32>
    %c2 = arith.constant 2 : index
    %c0_66 = arith.constant 0 : index
    %236 = vector.load %arg5[%c2, %c0_66] : memref<40x128xf32, #tpu.memory_space<vmem>>, vector<1x128xf32>
    %c3 = arith.constant 3 : index
    %c0_67 = arith.constant 0 : index
    %237 = vector.load %arg5[%c3, %c0_67] : memref<40x128xf32, #tpu.memory_space<vmem>>, vector<1x128xf32>
    %238 = vector.broadcast %5 : vector<8x1xf32> to vector<8x128xf32>
    %239 = arith.mulf %235, %238 : vector<8x128xf32>
    %cst_68 = arith.constant dense<0.000000e+00> : vector<128xf32>
    %240 = vector.multi_reduction <add>, %239, %cst_68 [0] : vector<8x128xf32> to vector<128xf32>
    %241 = vector.shape_cast %240 : vector<128xf32> to vector<1x128xf32>
    %242 = vector.broadcast %7 : f32 to vector<1x128xf32>
    %243 = arith.mulf %241, %242 : vector<1x128xf32>
    %244 = vector.broadcast %243 : vector<1x128xf32> to vector<8x128xf32>
    %245 = arith.subf %235, %244 : vector<8x128xf32>
    %246 = vector.broadcast %5 : vector<8x1xf32> to vector<8x128xf32>
    %247 = arith.mulf %245, %246 : vector<8x128xf32>
    %248 = arith.mulf %247, %247 : vector<8x128xf32>
    %cst_69 = arith.constant dense<0.000000e+00> : vector<128xf32>
    %249 = vector.multi_reduction <add>, %248, %cst_69 [0] : vector<8x128xf32> to vector<128xf32>
    %250 = vector.shape_cast %249 : vector<128xf32> to vector<1x128xf32>
    %251 = vector.broadcast %7 : f32 to vector<1x128xf32>
    %252 = arith.mulf %250, %251 : vector<1x128xf32>
    %cst_70 = arith.constant 9.99999974E-6 : f32
    %253 = vector.broadcast %cst_70 : f32 to vector<1x128xf32>
    %254 = arith.addf %252, %253 : vector<1x128xf32>
    %255 = math.rsqrt %254 : vector<1x128xf32>
    %256 = arith.mulf %236, %255 : vector<1x128xf32>
    %257 = arith.mulf %243, %256 : vector<1x128xf32>
    %258 = arith.subf %237, %257 : vector<1x128xf32>
    %259 = vector.broadcast %256 : vector<1x128xf32> to vector<8x128xf32>
    %260 = arith.mulf %235, %259 : vector<8x128xf32>
    %261 = vector.broadcast %258 : vector<1x128xf32> to vector<8x128xf32>
    %262 = arith.addf %260, %261 : vector<8x128xf32>
    %263 = arith.truncf %234 : vector<8x128xf32> to vector<8x128xbf16>
    %c0_71 = arith.constant 0 : index
    %c1024 = arith.constant 1024 : index
    %264 = vector.load %arg4[%c0_71, %c1024] : memref<128x2944xbf16, #tpu.memory_space<vmem>>, vector<128x512xbf16>
    %cst_72 = arith.constant dense<0.000000e+00> : vector<8x512xf32>
    %265 = tpu.matmul %263, %264, %cst_72 {dimension_numbers = #tpu.dot_dimension_numbers<[1], [0], [0], [1], [0, 0, 1, 1], [], []>} : vector<8x128xbf16>, vector<128x512xbf16>, vector<8x512xf32> -> vector<8x512xf32>
    %266 = arith.truncf %262 : vector<8x128xf32> to vector<8x128xbf16>
    %c0_73 = arith.constant 0 : index
    %c1536 = arith.constant 1536 : index
    %267 = vector.load %arg4[%c0_73, %c1536] : memref<128x2944xbf16, #tpu.memory_space<vmem>>, vector<128x512xbf16>
    %cst_74 = arith.constant dense<0.000000e+00> : vector<8x512xf32>
    %268 = tpu.matmul %266, %267, %cst_74 {dimension_numbers = #tpu.dot_dimension_numbers<[1], [0], [0], [1], [0, 0, 1, 1], [], []>} : vector<8x128xbf16>, vector<128x512xbf16>, vector<8x512xf32> -> vector<8x512xf32>
    %269 = vector.extract_strided_slice %265 {offsets = [0, 0], sizes = [8, 128], strides = [1, 1]} : vector<8x512xf32> to vector<8x128xf32>
    %270 = vector.extract_strided_slice %268 {offsets = [0, 0], sizes = [8, 128], strides = [1, 1]} : vector<8x512xf32> to vector<8x128xf32>
    %271 = arith.addf %269, %270 : vector<8x128xf32>
    %c22 = arith.constant 22 : index
    %c0_75 = arith.constant 0 : index
    %272 = vector.load %arg5[%c22, %c0_75] : memref<40x128xf32, #tpu.memory_space<vmem>>, vector<1x128xf32>
    %273 = vector.broadcast %272 : vector<1x128xf32> to vector<8x128xf32>
    %274 = arith.addf %271, %273 : vector<8x128xf32>
    %275 = vector.extract_strided_slice %265 {offsets = [0, 128], sizes = [8, 128], strides = [1, 1]} : vector<8x512xf32> to vector<8x128xf32>
    %276 = vector.extract_strided_slice %268 {offsets = [0, 128], sizes = [8, 128], strides = [1, 1]} : vector<8x512xf32> to vector<8x128xf32>
    %277 = arith.addf %275, %276 : vector<8x128xf32>
    %c24 = arith.constant 24 : index
    %c0_76 = arith.constant 0 : index
    %278 = vector.load %arg5[%c24, %c0_76] : memref<40x128xf32, #tpu.memory_space<vmem>>, vector<1x128xf32>
    %279 = vector.broadcast %278 : vector<1x128xf32> to vector<8x128xf32>
    %280 = arith.addf %277, %279 : vector<8x128xf32>
    %281 = vector.extract_strided_slice %265 {offsets = [0, 256], sizes = [8, 128], strides = [1, 1]} : vector<8x512xf32> to vector<8x128xf32>
    %282 = vector.extract_strided_slice %268 {offsets = [0, 256], sizes = [8, 128], strides = [1, 1]} : vector<8x512xf32> to vector<8x128xf32>
    %283 = arith.addf %281, %282 : vector<8x128xf32>
    %284 = vector.extract_strided_slice %265 {offsets = [0, 384], sizes = [8, 128], strides = [1, 1]} : vector<8x512xf32> to vector<8x128xf32>
    %285 = vector.extract_strided_slice %268 {offsets = [0, 384], sizes = [8, 128], strides = [1, 1]} : vector<8x512xf32> to vector<8x128xf32>
    %286 = arith.addf %284, %285 : vector<8x128xf32>
    %c18 = arith.constant 18 : index
    %c0_77 = arith.constant 0 : index
    %287 = vector.load %arg5[%c18, %c0_77] : memref<40x128xf32, #tpu.memory_space<vmem>>, vector<1x128xf32>
    %c19 = arith.constant 19 : index
    %c0_78 = arith.constant 0 : index
    %288 = vector.load %arg5[%c19, %c0_78] : memref<40x128xf32, #tpu.memory_space<vmem>>, vector<1x128xf32>
    %289 = vector.broadcast %5 : vector<8x1xf32> to vector<8x128xf32>
    %290 = arith.mulf %274, %289 : vector<8x128xf32>
    %cst_79 = arith.constant dense<0.000000e+00> : vector<128xf32>
    %291 = vector.multi_reduction <add>, %290, %cst_79 [0] : vector<8x128xf32> to vector<128xf32>
    %292 = vector.shape_cast %291 : vector<128xf32> to vector<1x128xf32>
    %293 = vector.broadcast %7 : f32 to vector<1x128xf32>
    %294 = arith.mulf %292, %293 : vector<1x128xf32>
    %295 = vector.broadcast %294 : vector<1x128xf32> to vector<8x128xf32>
    %296 = arith.subf %274, %295 : vector<8x128xf32>
    %297 = vector.broadcast %5 : vector<8x1xf32> to vector<8x128xf32>
    %298 = arith.mulf %296, %297 : vector<8x128xf32>
    %299 = arith.mulf %298, %298 : vector<8x128xf32>
    %cst_80 = arith.constant dense<0.000000e+00> : vector<128xf32>
    %300 = vector.multi_reduction <add>, %299, %cst_80 [0] : vector<8x128xf32> to vector<128xf32>
    %301 = vector.shape_cast %300 : vector<128xf32> to vector<1x128xf32>
    %302 = vector.broadcast %7 : f32 to vector<1x128xf32>
    %303 = arith.mulf %301, %302 : vector<1x128xf32>
    %cst_81 = arith.constant 9.99999974E-6 : f32
    %304 = vector.broadcast %cst_81 : f32 to vector<1x128xf32>
    %305 = arith.addf %303, %304 : vector<1x128xf32>
    %306 = math.rsqrt %305 : vector<1x128xf32>
    %307 = arith.mulf %287, %306 : vector<1x128xf32>
    %308 = arith.mulf %294, %307 : vector<1x128xf32>
    %309 = arith.subf %288, %308 : vector<1x128xf32>
    %310 = vector.broadcast %307 : vector<1x128xf32> to vector<8x128xf32>
    %311 = arith.mulf %274, %310 : vector<8x128xf32>
    %312 = vector.broadcast %309 : vector<1x128xf32> to vector<8x128xf32>
    %313 = arith.addf %311, %312 : vector<8x128xf32>
    %cst_82 = arith.constant 0.000000e+00 : f32
    %314 = vector.broadcast %cst_82 : f32 to vector<8x128xf32>
    %315 = arith.cmpf oge, %313, %314 : vector<8x128xf32>
    %cst_83 = arith.constant 2.000000e-01 : f32
    %316 = vector.broadcast %cst_83 : f32 to vector<8x128xf32>
    %317 = arith.mulf %316, %313 : vector<8x128xf32>
    %318 = arith.select %315, %313, %317 : vector<8x128xi1>, vector<8x128xf32>
    %319 = arith.truncf %318 : vector<8x128xf32> to vector<8x128xbf16>
    %c0_84 = arith.constant 0 : index
    %c2688 = arith.constant 2688 : index
    %320 = vector.load %arg4[%c0_84, %c2688] : memref<128x2944xbf16, #tpu.memory_space<vmem>>, vector<128x128xbf16>
    %cst_85 = arith.constant dense<0.000000e+00> : vector<8x128xf32>
    %321 = tpu.matmul %319, %320, %cst_85 {dimension_numbers = #tpu.dot_dimension_numbers<[1], [0], [0], [1], [0, 0, 1, 1], [], []>} : vector<8x128xbf16>, vector<128x128xbf16>, vector<8x128xf32> -> vector<8x128xf32>
    %c23 = arith.constant 23 : index
    %c0_86 = arith.constant 0 : index
    %322 = vector.load %arg5[%c23, %c0_86] : memref<40x128xf32, #tpu.memory_space<vmem>>, vector<1x128xf32>
    %323 = vector.broadcast %322 : vector<1x128xf32> to vector<8x128xf32>
    %324 = arith.addf %321, %323 : vector<8x128xf32>
    %c20 = arith.constant 20 : index
    %c0_87 = arith.constant 0 : index
    %325 = vector.load %arg5[%c20, %c0_87] : memref<40x128xf32, #tpu.memory_space<vmem>>, vector<1x128xf32>
    %c21 = arith.constant 21 : index
    %c0_88 = arith.constant 0 : index
    %326 = vector.load %arg5[%c21, %c0_88] : memref<40x128xf32, #tpu.memory_space<vmem>>, vector<1x128xf32>
    %327 = vector.broadcast %5 : vector<8x1xf32> to vector<8x128xf32>
    %328 = arith.mulf %324, %327 : vector<8x128xf32>
    %cst_89 = arith.constant dense<0.000000e+00> : vector<128xf32>
    %329 = vector.multi_reduction <add>, %328, %cst_89 [0] : vector<8x128xf32> to vector<128xf32>
    %330 = vector.shape_cast %329 : vector<128xf32> to vector<1x128xf32>
    %331 = vector.broadcast %7 : f32 to vector<1x128xf32>
    %332 = arith.mulf %330, %331 : vector<1x128xf32>
    %333 = vector.broadcast %332 : vector<1x128xf32> to vector<8x128xf32>
    %334 = arith.subf %324, %333 : vector<8x128xf32>
    %335 = vector.broadcast %5 : vector<8x1xf32> to vector<8x128xf32>
    %336 = arith.mulf %334, %335 : vector<8x128xf32>
    %337 = arith.mulf %336, %336 : vector<8x128xf32>
    %cst_90 = arith.constant dense<0.000000e+00> : vector<128xf32>
    %338 = vector.multi_reduction <add>, %337, %cst_90 [0] : vector<8x128xf32> to vector<128xf32>
    %339 = vector.shape_cast %338 : vector<128xf32> to vector<1x128xf32>
    %340 = vector.broadcast %7 : f32 to vector<1x128xf32>
    %341 = arith.mulf %339, %340 : vector<1x128xf32>
    %cst_91 = arith.constant 9.99999974E-6 : f32
    %342 = vector.broadcast %cst_91 : f32 to vector<1x128xf32>
    %343 = arith.addf %341, %342 : vector<1x128xf32>
    %344 = math.rsqrt %343 : vector<1x128xf32>
    %345 = arith.mulf %325, %344 : vector<1x128xf32>
    %346 = arith.mulf %332, %345 : vector<1x128xf32>
    %347 = arith.subf %326, %346 : vector<1x128xf32>
    %348 = vector.broadcast %345 : vector<1x128xf32> to vector<8x128xf32>
    %349 = arith.mulf %324, %348 : vector<8x128xf32>
    %350 = vector.broadcast %347 : vector<1x128xf32> to vector<8x128xf32>
    %351 = arith.addf %349, %350 : vector<8x128xf32>
    %cst_92 = arith.constant 0.000000e+00 : f32
    %352 = vector.broadcast %cst_92 : f32 to vector<8x128xf32>
    %353 = arith.cmpf oge, %280, %352 : vector<8x128xf32>
    %cst_93 = arith.constant 2.000000e-01 : f32
    %354 = vector.broadcast %cst_93 : f32 to vector<8x128xf32>
    %355 = arith.mulf %354, %280 : vector<8x128xf32>
    %356 = arith.select %353, %280, %355 : vector<8x128xi1>, vector<8x128xf32>
    %357 = arith.addf %356, %351 : vector<8x128xf32>
    %cst_94 = arith.constant 0.000000e+00 : f32
    %358 = vector.broadcast %cst_94 : f32 to vector<8x128xf32>
    %359 = arith.cmpf oge, %357, %358 : vector<8x128xf32>
    %cst_95 = arith.constant 2.000000e-01 : f32
    %360 = vector.broadcast %cst_95 : f32 to vector<8x128xf32>
    %361 = arith.mulf %360, %357 : vector<8x128xf32>
    %362 = arith.select %359, %357, %361 : vector<8x128xi1>, vector<8x128xf32>
    %363 = arith.truncf %362 : vector<8x128xf32> to vector<8x128xbf16>
    %c0_96 = arith.constant 0 : index
    %c2048 = arith.constant 2048 : index
    %364 = vector.load %arg4[%c0_96, %c2048] : memref<128x2944xbf16, #tpu.memory_space<vmem>>, vector<128x256xbf16>
    %cst_97 = arith.constant dense<0.000000e+00> : vector<8x256xf32>
    %365 = tpu.matmul %363, %364, %cst_97 {dimension_numbers = #tpu.dot_dimension_numbers<[1], [0], [0], [1], [0, 0, 1, 1], [], []>} : vector<8x128xbf16>, vector<128x256xbf16>, vector<8x256xf32> -> vector<8x256xf32>
    %366 = vector.extract_strided_slice %365 {offsets = [0, 0], sizes = [8, 128], strides = [1, 1]} : vector<8x256xf32> to vector<8x128xf32>
    %367 = arith.addf %283, %366 : vector<8x128xf32>
    %c29 = arith.constant 29 : index
    %c0_98 = arith.constant 0 : index
    %368 = vector.load %arg5[%c29, %c0_98] : memref<40x128xf32, #tpu.memory_space<vmem>>, vector<1x128xf32>
    %369 = vector.broadcast %368 : vector<1x128xf32> to vector<8x128xf32>
    %370 = arith.addf %367, %369 : vector<8x128xf32>
    %371 = vector.extract_strided_slice %365 {offsets = [0, 128], sizes = [8, 128], strides = [1, 1]} : vector<8x256xf32> to vector<8x128xf32>
    %372 = arith.addf %286, %371 : vector<8x128xf32>
    %c31 = arith.constant 31 : index
    %c0_99 = arith.constant 0 : index
    %373 = vector.load %arg5[%c31, %c0_99] : memref<40x128xf32, #tpu.memory_space<vmem>>, vector<1x128xf32>
    %374 = vector.broadcast %373 : vector<1x128xf32> to vector<8x128xf32>
    %375 = arith.addf %372, %374 : vector<8x128xf32>
    %c25 = arith.constant 25 : index
    %c0_100 = arith.constant 0 : index
    %376 = vector.load %arg5[%c25, %c0_100] : memref<40x128xf32, #tpu.memory_space<vmem>>, vector<1x128xf32>
    %c26 = arith.constant 26 : index
    %c0_101 = arith.constant 0 : index
    %377 = vector.load %arg5[%c26, %c0_101] : memref<40x128xf32, #tpu.memory_space<vmem>>, vector<1x128xf32>
    %378 = vector.broadcast %5 : vector<8x1xf32> to vector<8x128xf32>
    %379 = arith.mulf %370, %378 : vector<8x128xf32>
    %cst_102 = arith.constant dense<0.000000e+00> : vector<128xf32>
    %380 = vector.multi_reduction <add>, %379, %cst_102 [0] : vector<8x128xf32> to vector<128xf32>
    %381 = vector.shape_cast %380 : vector<128xf32> to vector<1x128xf32>
    %382 = vector.broadcast %7 : f32 to vector<1x128xf32>
    %383 = arith.mulf %381, %382 : vector<1x128xf32>
    %384 = vector.broadcast %383 : vector<1x128xf32> to vector<8x128xf32>
    %385 = arith.subf %370, %384 : vector<8x128xf32>
    %386 = vector.broadcast %5 : vector<8x1xf32> to vector<8x128xf32>
    %387 = arith.mulf %385, %386 : vector<8x128xf32>
    %388 = arith.mulf %387, %387 : vector<8x128xf32>
    %cst_103 = arith.constant dense<0.000000e+00> : vector<128xf32>
    %389 = vector.multi_reduction <add>, %388, %cst_103 [0] : vector<8x128xf32> to vector<128xf32>
    %390 = vector.shape_cast %389 : vector<128xf32> to vector<1x128xf32>
    %391 = vector.broadcast %7 : f32 to vector<1x128xf32>
    %392 = arith.mulf %390, %391 : vector<1x128xf32>
    %cst_104 = arith.constant 9.99999974E-6 : f32
    %393 = vector.broadcast %cst_104 : f32 to vector<1x128xf32>
    %394 = arith.addf %392, %393 : vector<1x128xf32>
    %395 = math.rsqrt %394 : vector<1x128xf32>
    %396 = arith.mulf %376, %395 : vector<1x128xf32>
    %397 = arith.mulf %383, %396 : vector<1x128xf32>
    %398 = arith.subf %377, %397 : vector<1x128xf32>
    %399 = vector.broadcast %396 : vector<1x128xf32> to vector<8x128xf32>
    %400 = arith.mulf %370, %399 : vector<8x128xf32>
    %401 = vector.broadcast %398 : vector<1x128xf32> to vector<8x128xf32>
    %402 = arith.addf %400, %401 : vector<8x128xf32>
    %cst_105 = arith.constant 0.000000e+00 : f32
    %403 = vector.broadcast %cst_105 : f32 to vector<8x128xf32>
    %404 = arith.cmpf oge, %402, %403 : vector<8x128xf32>
    %cst_106 = arith.constant 2.000000e-01 : f32
    %405 = vector.broadcast %cst_106 : f32 to vector<8x128xf32>
    %406 = arith.mulf %405, %402 : vector<8x128xf32>
    %407 = arith.select %404, %402, %406 : vector<8x128xi1>, vector<8x128xf32>
    %408 = arith.truncf %407 : vector<8x128xf32> to vector<8x128xbf16>
    %c0_107 = arith.constant 0 : index
    %c2816 = arith.constant 2816 : index
    %409 = vector.load %arg4[%c0_107, %c2816] : memref<128x2944xbf16, #tpu.memory_space<vmem>>, vector<128x128xbf16>
    %cst_108 = arith.constant dense<0.000000e+00> : vector<8x128xf32>
    %410 = tpu.matmul %408, %409, %cst_108 {dimension_numbers = #tpu.dot_dimension_numbers<[1], [0], [0], [1], [0, 0, 1, 1], [], []>} : vector<8x128xbf16>, vector<128x128xbf16>, vector<8x128xf32> -> vector<8x128xf32>
    %c30 = arith.constant 30 : index
    %c0_109 = arith.constant 0 : index
    %411 = vector.load %arg5[%c30, %c0_109] : memref<40x128xf32, #tpu.memory_space<vmem>>, vector<1x128xf32>
    %412 = vector.broadcast %411 : vector<1x128xf32> to vector<8x128xf32>
    %413 = arith.addf %410, %412 : vector<8x128xf32>
    %c27 = arith.constant 27 : index
    %c0_110 = arith.constant 0 : index
    %414 = vector.load %arg5[%c27, %c0_110] : memref<40x128xf32, #tpu.memory_space<vmem>>, vector<1x128xf32>
    %c28 = arith.constant 28 : index
    %c0_111 = arith.constant 0 : index
    %415 = vector.load %arg5[%c28, %c0_111] : memref<40x128xf32, #tpu.memory_space<vmem>>, vector<1x128xf32>
    %416 = vector.broadcast %5 : vector<8x1xf32> to vector<8x128xf32>
    %417 = arith.mulf %413, %416 : vector<8x128xf32>
    %cst_112 = arith.constant dense<0.000000e+00> : vector<128xf32>
    %418 = vector.multi_reduction <add>, %417, %cst_112 [0] : vector<8x128xf32> to vector<128xf32>
    %419 = vector.shape_cast %418 : vector<128xf32> to vector<1x128xf32>
    %420 = vector.broadcast %7 : f32 to vector<1x128xf32>
    %421 = arith.mulf %419, %420 : vector<1x128xf32>
    %422 = vector.broadcast %421 : vector<1x128xf32> to vector<8x128xf32>
    %423 = arith.subf %413, %422 : vector<8x128xf32>
    %424 = vector.broadcast %5 : vector<8x1xf32> to vector<8x128xf32>
    %425 = arith.mulf %423, %424 : vector<8x128xf32>
    %426 = arith.mulf %425, %425 : vector<8x128xf32>
    %cst_113 = arith.constant dense<0.000000e+00> : vector<128xf32>
    %427 = vector.multi_reduction <add>, %426, %cst_113 [0] : vector<8x128xf32> to vector<128xf32>
    %428 = vector.shape_cast %427 : vector<128xf32> to vector<1x128xf32>
    %429 = vector.broadcast %7 : f32 to vector<1x128xf32>
    %430 = arith.mulf %428, %429 : vector<1x128xf32>
    %cst_114 = arith.constant 9.99999974E-6 : f32
    %431 = vector.broadcast %cst_114 : f32 to vector<1x128xf32>
    %432 = arith.addf %430, %431 : vector<1x128xf32>
    %433 = math.rsqrt %432 : vector<1x128xf32>
    %434 = arith.mulf %414, %433 : vector<1x128xf32>
    %435 = arith.mulf %421, %434 : vector<1x128xf32>
    %436 = arith.subf %415, %435 : vector<1x128xf32>
    %437 = vector.broadcast %434 : vector<1x128xf32> to vector<8x128xf32>
    %438 = arith.mulf %413, %437 : vector<8x128xf32>
    %439 = vector.broadcast %436 : vector<1x128xf32> to vector<8x128xf32>
    %440 = arith.addf %438, %439 : vector<8x128xf32>
    %cst_115 = arith.constant 0.000000e+00 : f32
    %441 = vector.broadcast %cst_115 : f32 to vector<8x128xf32>
    %442 = arith.cmpf oge, %375, %441 : vector<8x128xf32>
    %cst_116 = arith.constant 2.000000e-01 : f32
    %443 = vector.broadcast %cst_116 : f32 to vector<8x128xf32>
    %444 = arith.mulf %443, %375 : vector<8x128xf32>
    %445 = arith.select %442, %375, %444 : vector<8x128xi1>, vector<8x128xf32>
    %446 = arith.addf %445, %440 : vector<8x128xf32>
    %cst_117 = arith.constant 0.000000e+00 : f32
    %447 = vector.broadcast %cst_117 : f32 to vector<8x128xf32>
    %448 = arith.cmpf oge, %446, %447 : vector<8x128xf32>
    %cst_118 = arith.constant 2.000000e-01 : f32
    %449 = vector.broadcast %cst_118 : f32 to vector<8x128xf32>
    %450 = arith.mulf %449, %446 : vector<8x128xf32>
    %451 = arith.select %448, %446, %450 : vector<8x128xi1>, vector<8x128xf32>
    %452 = arith.truncf %451 : vector<8x128xf32> to vector<8x128xbf16>
    %c0_119 = arith.constant 0 : index
    %c2304 = arith.constant 2304 : index
    %453 = vector.load %arg4[%c0_119, %c2304] : memref<128x2944xbf16, #tpu.memory_space<vmem>>, vector<128x128xbf16>
    %cst_120 = arith.constant dense<0.000000e+00> : vector<8x128xf32>
    %454 = tpu.matmul %452, %453, %cst_120 {dimension_numbers = #tpu.dot_dimension_numbers<[1], [0], [0], [1], [0, 0, 1, 1], [], []>} : vector<8x128xbf16>, vector<128x128xbf16>, vector<8x128xf32> -> vector<8x128xf32>
    %c34 = arith.constant 34 : index
    %c0_121 = arith.constant 0 : index
    %455 = vector.load %arg5[%c34, %c0_121] : memref<40x128xf32, #tpu.memory_space<vmem>>, vector<1x128xf32>
    %456 = vector.broadcast %455 : vector<1x128xf32> to vector<8x128xf32>
    %457 = arith.addf %454, %456 : vector<8x128xf32>
    %458 = tpu.concatenate %220, %231, %234 in 1 : vector<8x128xf32>, vector<8x128xf32>, vector<8x128xf32> -> vector<8x384xf32>
    %c0_122 = arith.constant 0 : index
    %c0_123 = arith.constant 0 : index
    %459 = vector.load %arg6[%c0_122, %c0_123] : memref<8x384xf32, #tpu.memory_space<vmem>>, vector<8x384xf32>
    tpu.vector_store %arg6[%c0_122, %c0_123], %458 {strides = array<i32>} : memref<8x384xf32, #tpu.memory_space<vmem>>, vector<8x384xf32>,
    %c0_124 = arith.constant 0 : index
    %c0_125 = arith.constant 0 : index
    %460 = vector.load %arg7[%c0_124, %c0_125] : memref<8x128xf32, #tpu.memory_space<vmem>>, vector<8x128xf32>
    tpu.vector_store %arg7[%c0_124, %c0_125], %457 {strides = array<i32>} : memref<8x128xf32, #tpu.memory_space<vmem>>, vector<8x128xf32>,
    return
  }
}

</mosaic_0001>

<llo_original>
// kernel: coarse_net_forward.1
$region0: #{coarse_net_forward.1}
  #allocation0 [shape = 'u32[]', space=smem, size = 0x4, offset = 0x4, fixed_abs, tag = 'smem constant byte address 0x4 - core index']
  #allocation1 [shape = 'u32[72,128]{1,0:T(1,128)}', space=vmem, size = 0x9000, scoped, tag = 'internal scratch']
  #allocation2 [shape = 's32[1,1]{1,0:T(1,128)S(6)}', space=smem, size = 0x200, scoped, tag = 'scoped memory for coarse_net_forward.1']
  %s0 = inlined_call_operand.<no memory space> [shape: s32[1,1], index: 0, kind: input, shape index: {}]
  %s1 = inlined_call_operand.vmem [shape: f32[8,128], index: 1, kind: input, shape index: {}]
  %s2 = inlined_call_operand.vmem [shape: f32[8,128], index: 2, kind: input, shape index: {}]
  %s3 = inlined_call_operand.vmem [shape: f32[8,128], index: 3, kind: input, shape index: {}]
  %s4 = inlined_call_operand.hbm [shape: bf16[128,2944], index: 4, kind: input, shape index: {}]
  %s5 = inlined_call_operand.vmem [shape: f32[40,128], index: 5, kind: input, shape index: {}]
  %s6 = inlined_call_operand.vmem [shape: f32[8,384], index: 6, kind: output, shape index: {0}]
  %s7 = inlined_call_operand.vmem [shape: f32[8,128], index: 7, kind: output, shape index: {1}]
  %8 = xla_tuple %s6, %s7
  %s9 = sld [smem:[#allocation0]]
  $region46: #{coarse_net_forward.1} parent=0
    _
  %s11 = ssub.s32 1, %s9
  %s12 = scalar_select 0, %s11, %s9
  %13 = sst [smem:[#allocation2]] %s0
  $region1: #{coarse_net_forward.1} parent=0
    #allocation3 [shape = 'u8[753664]{0}', space=vmem, size = 0xb8000, scoped, tag = 'input window, operand 4, single buffered']
    #allocation4 [shape = 's32[1]{0}', space=sflag, size = 0x4, scoped, tag = 'scoped memory for coarse_net_forward.1']
    %14 = vsyncpa [#allocation4], 0
    // Predicated region
    $region2: #{coarse_net_forward.1} parent=1 // pred_check
      _
    $region3: #{coarse_net_forward.1} parent=1 // pred_check_branch
      %16 = sbr.rel (0) target = $region5
    $region4: #{coarse_net_forward.1} parent=1 // pred_region
      _
    $region5: #{coarse_net_forward.1} parent=1 // pred_fallthru
      _
    // Predicated region
    $region6: #{coarse_net_forward.1} parent=1 // pred_check
      _
    $region7: #{coarse_net_forward.1} parent=1 // pred_check_branch
      %18 = sbr.rel (0) target = $region9
    $region8: #{coarse_net_forward.1} parent=1 // pred_region
      _
    $region9: #{coarse_net_forward.1} parent=1 // pred_fallthru
      _
    // Predicated region
    $region10: #{coarse_net_forward.1} parent=1 // pred_check
      _
    $region11: #{coarse_net_forward.1} parent=1 // pred_check_branch
      %20 = sbr.rel (0) target = $region13
    $region12: #{coarse_net_forward.1} parent=1 // pred_region
      _
    $region13: #{coarse_net_forward.1} parent=1 // pred_fallthru
      _
    // Predicated region
    $region14: #{coarse_net_forward.1} parent=1 // pred_check
      _
    $region15: #{coarse_net_forward.1} parent=1 // pred_check_branch
      %22 = sbr.rel (0) target = $region17
    $region16: #{coarse_net_forward.1} parent=1 // pred_region
      _
    $region17: #{coarse_net_forward.1} parent=1 // pred_fallthru
      _
    // Predicated region
    $region18: #{coarse_net_forward.1} parent=1 // pred_check
      _
    $region19: #{coarse_net_forward.1} parent=1 // pred_check_branch
      %24 = sbr.rel (0) target = $region21
    $region20: #{coarse_net_forward.1} parent=1 // pred_region
      %26 = vsyncadd [#allocation4], 0
      %s27 = sshll.u32 %s4, 4
      %s28 = int_to_ptr.hbm [resolvable:$true] %s27
      %s29 = sshll.u32 [#allocation3], 4
      %s30 = int_to_ptr.vmem [resolvable:$true] %s29
      %35 = dma.hbm_to_vmem [thread:$0]  %s28, 23552, %s30, [#allocation4], 1472, 1472, 92
    $region21: #{coarse_net_forward.1} parent=1 // pred_fallthru
      _
    // Predicated region
    $region22: #{coarse_net_forward.1} parent=1 // pred_check
      _
    $region23: #{coarse_net_forward.1} parent=1 // pred_check_branch
      %37 = sbr.rel (0) target = $region25
    $region24: #{coarse_net_forward.1} parent=1 // pred_region
      _
    $region25: #{coarse_net_forward.1} parent=1 // pred_fallthru
      _
    // Predicated region
    $region26: #{coarse_net_forward.1} parent=1 // pred_check
      _
    $region27: #{coarse_net_forward.1} parent=1 // pred_check_branch
      %39 = sbr.rel (0) target = $region29
    $region28: #{coarse_net_forward.1} parent=1 // pred_region
      %41 = dma.done [#allocation4], 23552
    $region29: #{coarse_net_forward.1} parent=1 // pred_fallthru
      _
    %s42 = sld [smem:[#allocation2]]
    %v43 = vlaneseq
    %v44 = vshrl.u32 %v43, 7
    %v45 = vstv %s42
    %vm46 = vcmp.lt.s32.totalorder %v44, %v45
    %v47 = vsel %vm46, 1, 0
    %v48 = vcvt.s32.f32 %v47
    %s49 = scvt.s32.f32 %s42
    %v50 = vstv %s49
    %v51 = vrcp.pop %v50
    %v52 = vmul.f32 %v50, %v51
    %v53 = vsub.f32 1.0, %v52
    %v54 = vmul.f32 %v51, %v53
    %v55 = vadd.f32 %v51, %v54
    %vm56 = vweird.f32 %v50
    %vm57 = vweird.f32 %v51
    %vm58 = vmor %vm56, %vm57
    %v59 = vsel %vm58, %v51, %v55
    %v60 = vand.u32 2147483647, %v50
    %vm61 = vcmp.eq.f32.partialorder %v60, 8.507059e+37
    %v62 = vand.u32 %v50, 2147483648
    %v63 = vor.u32 1.1754944e-38, %v62
    %v64 = vsel %vm61, %v63, %v59
    %s65 = vtos %v64
    %v66 = vld [vmem:[%s1] sm:$0xff]
    %v67 = vld [vmem:[%s5] sm:$0x1]
    %v68 = vld [vmem:[%s5 + $0x1] sm:$0x1]
    %v69 = vmul.f32 %v66, %v48
    %v70 = vrot.slane %v69, 4
    %v71 = vadd.f32 %v69, %v70
    %v72 = vrot.slane %v71, 2
    %v73 = vadd.f32 %v71, %v72
    %v74 = vrot.slane %v73, 1
    %v75 = vadd.f32 %v73, %v74
    %v76 = vstv %s65
    %v77 = vmul.f32 %v75, %v76
    %v78 = vsub.f32 %v66, %v77
    %v79 = vmul.f32 %v78, %v48
    %v80 = vmul.f32 %v79, %v79
    %v81 = vrot.slane %v80, 4
    %v82 = vadd.f32 %v80, %v81
    %v83 = vrot.slane %v82, 2
    %v84 = vadd.f32 %v82, %v83
    %v85 = vrot.slane %v84, 1
    %v86 = vadd.f32 %v84, %v85
    %v87 = vmul.f32 %v86, %v76
    %v88 = vadd.f32 %v87, 1e-05
    %v89 = vrsqrt.pop %v88
    %v90 = vmul.f32 %v89, %v88
    %v91 = vmul.f32 %v90, %v89
    %v92 = vmul.f32 0.5, %v91
    %v93 = vsub.f32 1.5, %v92
    %v94 = vmul.f32 %v89, %v93
    %vm95 = vweird.f32 %v88
    %vm96 = vweird.f32 %v89
    %vm97 = vmor %vm95, %vm96
    %v98 = vsel %vm97, %v89, %v94
    %v99 = vmul.f32 %v67, %v98
    %v100 = vmul.f32 %v77, %v99
    %v101 = vsub.f32 %v68, %v100
    %v102 = vperm.slane %v99, 0
    %v103 = vmul.f32 %v66, %v102
    %v104 = vperm.slane %v101, 0
    %v105 = vadd.f32 %v103, %v104
    %v106 = vpack.c.bf16 %v105, %v105
    %v107 = vld [vmem:[#allocation3] sm:$0xff]
    %v108 = vld [vmem:[#allocation3 + $0x8] sm:$0xff]
    %v109 = vld [vmem:[#allocation3 + $0x5c] sm:$0xff]
    %v110 = vld [vmem:[#allocation3 + $0x64] sm:$0xff]
    %v111 = vld [vmem:[#allocation3 + $0xb8] sm:$0xff]
    %v112 = vld [vmem:[#allocation3 + $0xc0] sm:$0xff]
    %v113 = vld [vmem:[#allocation3 + $0x114] sm:$0xff]
    %v114 = vld [vmem:[#allocation3 + $0x11c] sm:$0xff]
    %v115 = vld [vmem:[#allocation3 + $0x170] sm:$0xff]
    %v116 = vld [vmem:[#allocation3 + $0x178] sm:$0xff]
    %v117 = vld [vmem:[#allocation3 + $0x1cc] sm:$0xff]
    %v118 = vld [vmem:[#allocation3 + $0x1d4] sm:$0xff]
    %v119 = vld [vmem:[#allocation3 + $0x228] sm:$0xff]
    %v120 = vld [vmem:[#allocation3 + $0x230] sm:$0xff]
    %v121 = vld [vmem:[#allocation3 + $0x284] sm:$0xff]
    %v122 = vld [vmem:[#allocation3 + $0x28c] sm:$0xff]
    %v123 = vld [vmem:[#allocation3 + $0x2e0] sm:$0xff]
    %v124 = vld [vmem:[#allocation3 + $0x2e8] sm:$0xff]
    %v125 = vld [vmem:[#allocation3 + $0x33c] sm:$0xff]
    %v126 = vld [vmem:[#allocation3 + $0x344] sm:$0xff]
    %v127 = vld [vmem:[#allocation3 + $0x398] sm:$0xff]
    %v128 = vld [vmem:[#allocation3 + $0x3a0] sm:$0xff]
    %v129 = vld [vmem:[#allocation3 + $0x3f4] sm:$0xff]
    %v130 = vld [vmem:[#allocation3 + $0x3fc] sm:$0xff]
    %v131 = vld [vmem:[#allocation3 + $0x450] sm:$0xff]
    %v132 = vld [vmem:[#allocation3 + $0x458] sm:$0xff]
    %v133 = vld [vmem:[#allocation3 + $0x4ac] sm:$0xff]
    %v134 = vld [vmem:[#allocation3 + $0x4b4] sm:$0xff]
    %v135 = vld [vmem:[#allocation3 + $0x508] sm:$0xff]
    %v136 = vld [vmem:[#allocation3 + $0x510] sm:$0xff]
    %v137 = vld [vmem:[#allocation3 + $0x564] sm:$0xff]
    %v138 = vld [vmem:[#allocation3 + $0x56c] sm:$0xff]
    %v171 = vunpack.c.l.b16 %v107
    %v172 = vunpack.c.h.b16 %v107
    %v173 = vunpack.c.l.b16 %v108
    %v174 = vunpack.c.h.b16 %v108
    %v175 = vunpack.c.l.b16 %v109
    %v176 = vunpack.c.h.b16 %v109
    %v177 = vunpack.c.l.b16 %v110
    %v178 = vunpack.c.h.b16 %v110
    %v179 = vunpack.c.l.b16 %v111
    %v180 = vunpack.c.h.b16 %v111
    %v181 = vunpack.c.l.b16 %v112
    %v182 = vunpack.c.h.b16 %v112
    %v183 = vunpack.c.l.b16 %v113
    %v184 = vunpack.c.h.b16 %v113
    %v185 = vunpack.c.l.b16 %v114
    %v186 = vunpack.c.h.b16 %v114
    %v187 = vunpack.c.l.b16 %v115
    %v188 = vunpack.c.h.b16 %v115
    %v189 = vunpack.c.l.b16 %v116
    %v190 = vunpack.c.h.b16 %v116
    %v191 = vunpack.c.l.b16 %v117
    %v192 = vunpack.c.h.b16 %v117
    %v193 = vunpack.c.l.b16 %v118
    %v194 = vunpack.c.h.b16 %v118
    %v195 = vunpack.c.l.b16 %v119
    %v196 = vunpack.c.h.b16 %v119
    %v197 = vunpack.c.l.b16 %v120
    %v198 = vunpack.c.h.b16 %v120
    %v199 = vunpack.c.l.b16 %v121
    %v200 = vunpack.c.h.b16 %v121
    %v201 = vunpack.c.l.b16 %v122
    %v202 = vunpack.c.h.b16 %v122
    %v203 = vunpack.c.l.b16 %v123
    %v204 = vunpack.c.h.b16 %v123
    %v205 = vunpack.c.l.b16 %v124
    %v206 = vunpack.c.h.b16 %v124
    %v207 = vunpack.c.l.b16 %v125
    %v208 = vunpack.c.h.b16 %v125
    %v209 = vunpack.c.l.b16 %v126
    %v210 = vunpack.c.h.b16 %v126
    %v211 = vunpack.c.l.b16 %v127
    %v212 = vunpack.c.h.b16 %v127
    %v213 = vunpack.c.l.b16 %v128
    %v214 = vunpack.c.h.b16 %v128
    %v215 = vunpack.c.l.b16 %v129
    %v216 = vunpack.c.h.b16 %v129
    %v217 = vunpack.c.l.b16 %v130
    %v218 = vunpack.c.h.b16 %v130
    %v219 = vunpack.c.l.b16 %v131
    %v220 = vunpack.c.h.b16 %v131
    %v221 = vunpack.c.l.b16 %v132
    %v222 = vunpack.c.h.b16 %v132
    %v223 = vunpack.c.l.b16 %v133
    %v224 = vunpack.c.h.b16 %v133
    %v225 = vunpack.c.l.b16 %v134
    %v226 = vunpack.c.h.b16 %v134
    %v227 = vunpack.c.l.b16 %v135
    %v228 = vunpack.c.h.b16 %v135
    %v229 = vunpack.c.l.b16 %v136
    %v230 = vunpack.c.h.b16 %v136
    %v231 = vunpack.c.l.b16 %v137
    %v232 = vunpack.c.h.b16 %v137
    %v233 = vunpack.c.l.b16 %v138
    %v234 = vunpack.c.h.b16 %v138
    %v235 = vpack.c.b16 %v175, %v171
    %v236 = vpack.c.b16 %v176, %v172
    %v237 = vpack.c.b16 %v177, %v173
    %v238 = vpack.c.b16 %v178, %v174
    %v239 = vpack.c.b16 %v183, %v179
    %v240 = vpack.c.b16 %v184, %v180
    %v241 = vpack.c.b16 %v185, %v181
    %v242 = vpack.c.b16 %v186, %v182
    %v243 = vpack.c.b16 %v191, %v187
    %v244 = vpack.c.b16 %v192, %v188
    %v245 = vpack.c.b16 %v193, %v189
    %v246 = vpack.c.b16 %v194, %v190
    %v247 = vpack.c.b16 %v199, %v195
    %v248 = vpack.c.b16 %v200, %v196
    %v249 = vpack.c.b16 %v201, %v197
    %v250 = vpack.c.b16 %v202, %v198
    %v251 = vpack.c.b16 %v207, %v203
    %v252 = vpack.c.b16 %v208, %v204
    %v253 = vpack.c.b16 %v209, %v205
    %v254 = vpack.c.b16 %v210, %v206
    %v255 = vpack.c.b16 %v215, %v211
    %v256 = vpack.c.b16 %v216, %v212
    %v257 = vpack.c.b16 %v217, %v213
    %v258 = vpack.c.b16 %v218, %v214
    %v259 = vpack.c.b16 %v223, %v219
    %v260 = vpack.c.b16 %v224, %v220
    %v261 = vpack.c.b16 %v225, %v221
    %v262 = vpack.c.b16 %v226, %v222
    %v263 = vpack.c.b16 %v231, %v227
    %v264 = vpack.c.b16 %v232, %v228
    %v265 = vpack.c.b16 %v233, %v229
    %v266 = vpack.c.b16 %v234, %v230
    %299 = vmatpush.bf16.msra.mxu0 %v263
    %300 = vmatpush.bf16.msra.mxu0 %v259
    %301 = vmatpush.bf16.msra.mxu0 %v255
    %302 = vmatpush.bf16.msra.mxu0 %v251
    %303 = vmatpush.bf16.msra.mxu0 %v247
    %304 = vmatpush.bf16.msra.mxu0 %v243
    %305 = vmatpush.bf16.msra.mxu0 %v239
    %306 = vmatpush.bf16.msra.mxu0 %v235
    %307 = vmatmul.bf16.gmra.mxu0 %v106
    %v308 = vpop.f32.mrf.mxu0
    %v309 = vadd.f32 0.0, %v308
    %v310 = vpop.f32.mrf.mxu0
    %311 = vdwg.mxu0
    %312 = vmatpush.bf16.msra.mxu0 %v264
    %313 = vmatpush.bf16.msra.mxu0 %v260
    %314 = vmatpush.bf16.msra.mxu0 %v256
    %315 = vmatpush.bf16.msra.mxu0 %v252
    %316 = vmatpush.bf16.msra.mxu0 %v248
    %317 = vmatpush.bf16.msra.mxu0 %v244
    %318 = vmatpush.bf16.msra.mxu0 %v240
    %319 = vmatpush.bf16.msra.mxu0 %v236
    %320 = vmatmul.bf16.gmra.mxu0 %v106
    %v321 = vpop.f32.mrf.mxu0
    %v322 = vadd.f32 0.0, %v321
    %v323 = vpop.f32.mrf.mxu0
    %324 = vdwg.mxu0
    %325 = vmatpush.bf16.msra.mxu0 %v265
    %326 = vmatpush.bf16.msra.mxu0 %v261
    %327 = vmatpush.bf16.msra.mxu0 %v257
    %328 = vmatpush.bf16.msra.mxu0 %v253
    %329 = vmatpush.bf16.msra.mxu0 %v249
    %330 = vmatpush.bf16.msra.mxu0 %v245
    %331 = vmatpush.bf16.msra.mxu0 %v241
    %332 = vmatpush.bf16.msra.mxu0 %v237
    %333 = vmatmul.bf16.gmra.mxu0 %v106
    %v334 = vpop.f32.mrf.mxu0
    %v335 = vadd.f32 0.0, %v334
    %v336 = vpop.f32.mrf.mxu0
    %337 = vdwg.mxu0
    %338 = vmatpush.bf16.msra.mxu0 %v266
    %339 = vmatpush.bf16.msra.mxu0 %v262
    %340 = vmatpush.bf16.msra.mxu0 %v258
    %341 = vmatpush.bf16.msra.mxu0 %v254
    %342 = vmatpush.bf16.msra.mxu0 %v250
    %343 = vmatpush.bf16.msra.mxu0 %v246
    %344 = vmatpush.bf16.msra.mxu0 %v242
    %345 = vmatpush.bf16.msra.mxu0 %v238
    %346 = vmatmul.bf16.gmra.mxu0 %v106
    %v347 = vpop.f32.mrf.mxu0
    %v348 = vadd.f32 0.0, %v347
    %v349 = vpop.f32.mrf.mxu0
    %350 = vdwg.mxu0
    %v351 = vld [vmem:[%s5 + $0x8] sm:$0x1]
    %v352 = vperm.slane %v351, 0
    %v353 = vadd.f32 %v309, %v352
    %v354 = vld [vmem:[%s5 + $0xa] sm:$0x1]
    %v355 = vperm.slane %v354, 0
    %v356 = vadd.f32 %v322, %v355
    %v357 = vld [vmem:[%s5 + $0x4] sm:$0x1]
    %v358 = vld [vmem:[%s5 + $0x5] sm:$0x1]
    %v359 = vmul.f32 %v353, %v48
    %v360 = vrot.slane %v359, 4
    %v361 = vadd.f32 %v359, %v360
    %v362 = vrot.slane %v361, 2
    %v363 = vadd.f32 %v361, %v362
    %v364 = vrot.slane %v363, 1
    %v365 = vadd.f32 %v363, %v364
    %v366 = vmul.f32 %v365, %v76
    %v367 = vsub.f32 %v353, %v366
    %v368 = vmul.f32 %v367, %v48
    %v369 = vmul.f32 %v368, %v368
    %v370 = vrot.slane %v369, 4
    %v371 = vadd.f32 %v369, %v370
    %v372 = vrot.slane %v371, 2
    %v373 = vadd.f32 %v371, %v372
    %v374 = vrot.slane %v373, 1
    %v375 = vadd.f32 %v373, %v374
    %v376 = vmul.f32 %v375, %v76
    %v377 = vadd.f32 %v376, 1e-05
    %v378 = vrsqrt.pop %v377
    %v379 = vmul.f32 %v378, %v377
    %v380 = vmul.f32 %v379, %v378
    %v381 = vmul.f32 0.5, %v380
    %v382 = vsub.f32 1.5, %v381
    %v383 = vmul.f32 %v378, %v382
    %vm384 = vweird.f32 %v377
    %vm385 = vweird.f32 %v378
    %vm386 = vmor %vm384, %vm385
    %v387 = vsel %vm386, %v378, %v383
    %v388 = vmul.f32 %v357, %v387
    %v389 = vmul.f32 %v366, %v388
    %v390 = vsub.f32 %v358, %v389
    %v391 = vperm.slane %v388, 0
    %v392 = vmul.f32 %v353, %v391
    %v393 = vperm.slane %v390, 0
    %v394 = vadd.f32 %v392, %v393
    %vm395 = vcmp.ge.f32.partialorder %v394, 0.0
    %v396 = vmul.f32 %v394, 0.2
    %v397 = vsel %vm395, %v394, %v396
    %v398 = vpack.c.bf16 %v397, %v397
    %v399 = vld [vmem:[#allocation3 + $0x4c] sm:$0xf]
    %v400 = vld [vmem:[#allocation3 + $0xa8] sm:$0xf]
    %v401 = vld [vmem:[#allocation3 + $0x104] sm:$0xf]
    %v402 = vld [vmem:[#allocation3 + $0x160] sm:$0xf]
    %v403 = vld [vmem:[#allocation3 + $0x1bc] sm:$0xf]
    %v404 = vld [vmem:[#allocation3 + $0x218] sm:$0xf]
    %v405 = vld [vmem:[#allocation3 + $0x274] sm:$0xf]
    %v406 = vld [vmem:[#allocation3 + $0x2d0] sm:$0xf]
    %v407 = vld [vmem:[#allocation3 + $0x32c] sm:$0xf]
    %v408 = vld [vmem:[#allocation3 + $0x388] sm:$0xf]
    %v409 = vld [vmem:[#allocation3 + $0x3e4] sm:$0xf]
    %v410 = vld [vmem:[#allocation3 + $0x440] sm:$0xf]
    %v411 = vld [vmem:[#allocation3 + $0x49c] sm:$0xf]
    %v412 = vld [vmem:[#allocation3 + $0x4f8] sm:$0xf]
    %v413 = vld [vmem:[#allocation3 + $0x554] sm:$0xf]
    %v414 = vld [vmem:[#allocation3 + $0x5b0] sm:$0xf]
    %v415 = vld [vmem:[%s5 + $0x9] sm:$0x1]
    %v416 = vperm.slane %v415, 0
    %v433 = vunpack.c.l.b16 %v399
    %v434 = vunpack.c.l.b16 %v400
    %v435 = vunpack.c.l.b16 %v401
    %v436 = vunpack.c.l.b16 %v402
    %v437 = vunpack.c.l.b16 %v403
    %v438 = vunpack.c.l.b16 %v404
    %v439 = vunpack.c.l.b16 %v405
    %v440 = vunpack.c.l.b16 %v406
    %v441 = vunpack.c.l.b16 %v407
    %v442 = vunpack.c.l.b16 %v408
    %v443 = vunpack.c.l.b16 %v409
    %v444 = vunpack.c.l.b16 %v410
    %v445 = vunpack.c.l.b16 %v411
    %v446 = vunpack.c.l.b16 %v412
    %v447 = vunpack.c.l.b16 %v413
    %v448 = vunpack.c.l.b16 %v414
    %v449 = vpack.c.b16 %v434, %v433
    %v450 = vpack.c.b16 %v436, %v435
    %v451 = vpack.c.b16 %v438, %v437
    %v452 = vpack.c.b16 %v440, %v439
    %v453 = vpack.c.b16 %v442, %v441
    %v454 = vpack.c.b16 %v444, %v443
    %v455 = vpack.c.b16 %v446, %v445
    %v456 = vpack.c.b16 %v448, %v447
    %465 = vmatpush.bf16.msra.mxu0 %v456
    %466 = vmatpush.bf16.msra.mxu0 %v455
    %467 = vmatpush.bf16.msra.mxu0 %v454
    %468 = vmatpush.bf16.msra.mxu0 %v453
    %469 = vmatpush.bf16.msra.mxu0 %v452
    %470 = vmatpush.bf16.msra.mxu0 %v451
    %471 = vmatpush.bf16.msra.mxu0 %v450
    %472 = vmatpush.bf16.msra.mxu0 %v449
    %473 = vmatmul.bf16.gmra.mxu0 %v398
    %v474 = vpop.f32.mrf.mxu0
    %v475 = vadd.f32 %v416, %v474
    %v476 = vpop.f32.mrf.mxu0
    %477 = vdwg.mxu0
    %v478 = vld [vmem:[%s5 + $0x6] sm:$0x1]
    %v479 = vld [vmem:[%s5 + $0x7] sm:$0x1]
    %v480 = vmul.f32 %v475, %v48
    %v481 = vrot.slane %v480, 4
    %v482 = vadd.f32 %v480, %v481
    %v483 = vrot.slane %v482, 2
    %v484 = vadd.f32 %v482, %v483
    %v485 = vrot.slane %v484, 1
    %v486 = vadd.f32 %v484, %v485
    %v487 = vmul.f32 %v486, %v76
    %v488 = vsub.f32 %v475, %v487
    %v489 = vmul.f32 %v488, %v48
    %v490 = vmul.f32 %v489, %v489
    %v491 = vrot.slane %v490, 4
    %v492 = vadd.f32 %v490, %v491
    %v493 = vrot.slane %v492, 2
    %v494 = vadd.f32 %v492, %v493
    %v495 = vrot.slane %v494, 1
    %v496 = vadd.f32 %v494, %v495
    %v497 = vmul.f32 %v496, %v76
    %v498 = vadd.f32 %v497, 1e-05
    %v499 = vrsqrt.pop %v498
    %v500 = vmul.f32 %v499, %v498
    %v501 = vmul.f32 %v500, %v499
    %v502 = vmul.f32 0.5, %v501
    %v503 = vsub.f32 1.5, %v502
    %v504 = vmul.f32 %v499, %v503
    %vm505 = vweird.f32 %v498
    %vm506 = vweird.f32 %v499
    %vm507 = vmor %vm505, %vm506
    %v508 = vsel %vm507, %v499, %v504
    %v509 = vmul.f32 %v478, %v508
    %v510 = vmul.f32 %v487, %v509
    %v511 = vsub.f32 %v479, %v510
    %v512 = vperm.slane %v509, 0
    %v513 = vmul.f32 %v475, %v512
    %v514 = vperm.slane %v511, 0
    %v515 = vadd.f32 %v513, %v514
    %vm516 = vcmp.ge.f32.partialorder %v356, 0.0
    %v517 = vmul.f32 %v356, 0.2
    %v518 = vsel %vm516, %v356, %v517
    %v519 = vadd.f32 %v518, %v515
    %vm520 = vcmp.ge.f32.partialorder %v519, 0.0
    %v521 = vmul.f32 %v519, 0.2
    %v522 = vsel %vm520, %v519, %v521
    %v523 = vpack.c.bf16 %v522, %v522
    %v524 = vld [vmem:[#allocation3 + $0x10] sm:$0xff]
    %v525 = vld [vmem:[#allocation3 + $0x6c] sm:$0xff]
    %v526 = vld [vmem:[#allocation3 + $0xc8] sm:$0xff]
    %v527 = vld [vmem:[#allocation3 + $0x124] sm:$0xff]
    %v528 = vld [vmem:[#allocation3 + $0x180] sm:$0xff]
    %v529 = vld [vmem:[#allocation3 + $0x1dc] sm:$0xff]
    %v530 = vld [vmem:[#allocation3 + $0x238] sm:$0xff]
    %v531 = vld [vmem:[#allocation3 + $0x294] sm:$0xff]
    %v532 = vld [vmem:[#allocation3 + $0x2f0] sm:$0xff]
    %v533 = vld [vmem:[#allocation3 + $0x34c] sm:$0xff]
    %v534 = vld [vmem:[#allocation3 + $0x3a8] sm:$0xff]
    %v535 = vld [vmem:[#allocation3 + $0x404] sm:$0xff]
    %v536 = vld [vmem:[#allocation3 + $0x460] sm:$0xff]
    %v537 = vld [vmem:[#allocation3 + $0x4bc] sm:$0xff]
    %v538 = vld [vmem:[#allocation3 + $0x518] sm:$0xff]
    %v539 = vld [vmem:[#allocation3 + $0x574] sm:$0xff]
    %v556 = vunpack.c.l.b16 %v524
    %v557 = vunpack.c.h.b16 %v524
    %v558 = vunpack.c.l.b16 %v525
    %v559 = vunpack.c.h.b16 %v525
    %v560 = vunpack.c.l.b16 %v526
    %v561 = vunpack.c.h.b16 %v526
    %v562 = vunpack.c.l.b16 %v527
    %v563 = vunpack.c.h.b16 %v527
    %v564 = vunpack.c.l.b16 %v528
    %v565 = vunpack.c.h.b16 %v528
    %v566 = vunpack.c.l.b16 %v529
    %v567 = vunpack.c.h.b16 %v529
    %v568 = vunpack.c.l.b16 %v530
    %v569 = vunpack.c.h.b16 %v530
    %v570 = vunpack.c.l.b16 %v531
    %v571 = vunpack.c.h.b16 %v531
    %v572 = vunpack.c.l.b16 %v532
    %v573 = vunpack.c.h.b16 %v532
    %v574 = vunpack.c.l.b16 %v533
    %v575 = vunpack.c.h.b16 %v533
    %v576 = vunpack.c.l.b16 %v534
    %v577 = vunpack.c.h.b16 %v534
    %v578 = vunpack.c.l.b16 %v535
    %v579 = vunpack.c.h.b16 %v535
    %v580 = vunpack.c.l.b16 %v536
    %v581 = vunpack.c.h.b16 %v536
    %v582 = vunpack.c.l.b16 %v537
    %v583 = vunpack.c.h.b16 %v537
    %v584 = vunpack.c.l.b16 %v538
    %v585 = vunpack.c.h.b16 %v538
    %v586 = vunpack.c.l.b16 %v539
    %v587 = vunpack.c.h.b16 %v539
    %v588 = vpack.c.b16 %v558, %v556
    %v589 = vpack.c.b16 %v559, %v557
    %v590 = vpack.c.b16 %v562, %v560
    %v591 = vpack.c.b16 %v563, %v561
    %v592 = vpack.c.b16 %v566, %v564
    %v593 = vpack.c.b16 %v567, %v565
    %v594 = vpack.c.b16 %v570, %v568
    %v595 = vpack.c.b16 %v571, %v569
    %v596 = vpack.c.b16 %v574, %v572
    %v597 = vpack.c.b16 %v575, %v573
    %v598 = vpack.c.b16 %v578, %v576
    %v599 = vpack.c.b16 %v579, %v577
    %v600 = vpack.c.b16 %v582, %v580
    %v601 = vpack.c.b16 %v583, %v581
    %v602 = vpack.c.b16 %v586, %v584
    %v603 = vpack.c.b16 %v587, %v585
    %620 = vmatpush.bf16.msra.mxu0 %v602
    %621 = vmatpush.bf16.msra.mxu0 %v600
    %622 = vmatpush.bf16.msra.mxu0 %v598
    %623 = vmatpush.bf16.msra.mxu0 %v596
    %624 = vmatpush.bf16.msra.mxu0 %v594
    %625 = vmatpush.bf16.msra.mxu0 %v592
    %626 = vmatpush.bf16.msra.mxu0 %v590
    %627 = vmatpush.bf16.msra.mxu0 %v588
    %628 = vmatmul.bf16.gmra.mxu0 %v523
    %v629 = vpop.f32.mrf.mxu0
    %v630 = vadd.f32 0.0, %v629
    %v631 = vpop.f32.mrf.mxu0
    %632 = vdwg.mxu0
    %633 = vmatpush.bf16.msra.mxu0 %v603
    %634 = vmatpush.bf16.msra.mxu0 %v601
    %635 = vmatpush.bf16.msra.mxu0 %v599
    %636 = vmatpush.bf16.msra.mxu0 %v597
    %637 = vmatpush.bf16.msra.mxu0 %v595
    %638 = vmatpush.bf16.msra.mxu0 %v593
    %639 = vmatpush.bf16.msra.mxu0 %v591
    %640 = vmatpush.bf16.msra.mxu0 %v589
    %641 = vmatmul.bf16.gmra.mxu0 %v523
    %v642 = vpop.f32.mrf.mxu0
    %v643 = vadd.f32 0.0, %v642
    %v644 = vpop.f32.mrf.mxu0
    %645 = vdwg.mxu0
    %v646 = vadd.f32 %v335, %v630
    %v647 = vld [vmem:[%s5 + $0xf] sm:$0x1]
    %v648 = vperm.slane %v647, 0
    %v649 = vadd.f32 %v646, %v648
    %v650 = vadd.f32 %v348, %v643
    %v651 = vld [vmem:[%s5 + $0x11] sm:$0x1]
    %v652 = vperm.slane %v651, 0
    %v653 = vadd.f32 %v650, %v652
    %v654 = vld [vmem:[%s5 + $0xb] sm:$0x1]
    %v655 = vld [vmem:[%s5 + $0xc] sm:$0x1]
    %v656 = vmul.f32 %v649, %v48
    %v657 = vrot.slane %v656, 4
    %v658 = vadd.f32 %v656, %v657
    %v659 = vrot.slane %v658, 2
    %v660 = vadd.f32 %v658, %v659
    %v661 = vrot.slane %v660, 1
    %v662 = vadd.f32 %v660, %v661
    %v663 = vmul.f32 %v662, %v76
    %v664 = vsub.f32 %v649, %v663
    %v665 = vmul.f32 %v664, %v48
    %v666 = vmul.f32 %v665, %v665
    %v667 = vrot.slane %v666, 4
    %v668 = vadd.f32 %v666, %v667
    %v669 = vrot.slane %v668, 2
    %v670 = vadd.f32 %v668, %v669
    %v671 = vrot.slane %v670, 1
    %v672 = vadd.f32 %v670, %v671
    %v673 = vmul.f32 %v672, %v76
    %v674 = vadd.f32 %v673, 1e-05
    %v675 = vrsqrt.pop %v674
    %v676 = vmul.f32 %v675, %v674
    %v677 = vmul.f32 %v676, %v675
    %v678 = vmul.f32 0.5, %v677
    %v679 = vsub.f32 1.5, %v678
    %v680 = vmul.f32 %v675, %v679
    %vm681 = vweird.f32 %v674
    %vm682 = vweird.f32 %v675
    %vm683 = vmor %vm681, %vm682
    %v684 = vsel %vm683, %v675, %v680
    %v685 = vmul.f32 %v654, %v684
    %v686 = vmul.f32 %v663, %v685
    %v687 = vsub.f32 %v655, %v686
    %v688 = vperm.slane %v685, 0
    %v689 = vmul.f32 %v649, %v688
    %v690 = vperm.slane %v687, 0
    %v691 = vadd.f32 %v689, %v690
    %vm692 = vcmp.ge.f32.partialorder %v691, 0.0
    %v693 = vmul.f32 %v691, 0.2
    %v694 = vsel %vm692, %v691, %v693
    %v695 = vpack.c.bf16 %v694, %v694
    %v696 = vld [vmem:[#allocation3 + $0x50] sm:$0xf]
    %v697 = vld [vmem:[#allocation3 + $0xac] sm:$0xf]
    %v698 = vld [vmem:[#allocation3 + $0x108] sm:$0xf]
    %v699 = vld [vmem:[#allocation3 + $0x164] sm:$0xf]
    %v700 = vld [vmem:[#allocation3 + $0x1c0] sm:$0xf]
    %v701 = vld [vmem:[#allocation3 + $0x21c] sm:$0xf]
    %v702 = vld [vmem:[#allocation3 + $0x278] sm:$0xf]
    %v703 = vld [vmem:[#allocation3 + $0x2d4] sm:$0xf]
    %v704 = vld [vmem:[#allocation3 + $0x330] sm:$0xf]
    %v705 = vld [vmem:[#allocation3 + $0x38c] sm:$0xf]
    %v706 = vld [vmem:[#allocation3 + $0x3e8] sm:$0xf]
    %v707 = vld [vmem:[#allocation3 + $0x444] sm:$0xf]
    %v708 = vld [vmem:[#allocation3 + $0x4a0] sm:$0xf]
    %v709 = vld [vmem:[#allocation3 + $0x4fc] sm:$0xf]
    %v710 = vld [vmem:[#allocation3 + $0x558] sm:$0xf]
    %v711 = vld [vmem:[#allocation3 + $0x5b4] sm:$0xf]
    %v712 = vld [vmem:[%s5 + $0x10] sm:$0x1]
    %v713 = vperm.slane %v712, 0
    %v730 = vunpack.c.l.b16 %v696
    %v731 = vunpack.c.l.b16 %v697
    %v732 = vunpack.c.l.b16 %v698
    %v733 = vunpack.c.l.b16 %v699
    %v734 = vunpack.c.l.b16 %v700
    %v735 = vunpack.c.l.b16 %v701
    %v736 = vunpack.c.l.b16 %v702
    %v737 = vunpack.c.l.b16 %v703
    %v738 = vunpack.c.l.b16 %v704
    %v739 = vunpack.c.l.b16 %v705
    %v740 = vunpack.c.l.b16 %v706
    %v741 = vunpack.c.l.b16 %v707
    %v742 = vunpack.c.l.b16 %v708
    %v743 = vunpack.c.l.b16 %v709
    %v744 = vunpack.c.l.b16 %v710
    %v745 = vunpack.c.l.b16 %v711
    %v746 = vpack.c.b16 %v731, %v730
    %v747 = vpack.c.b16 %v733, %v732
    %v748 = vpack.c.b16 %v735, %v734
    %v749 = vpack.c.b16 %v737, %v736
    %v750 = vpack.c.b16 %v739, %v738
    %v751 = vpack.c.b16 %v741, %v740
    %v752 = vpack.c.b16 %v743, %v742
    %v753 = vpack.c.b16 %v745, %v744
    %762 = vmatpush.bf16.msra.mxu0 %v753
    %763 = vmatpush.bf16.msra.mxu0 %v752
    %764 = vmatpush.bf16.msra.mxu0 %v751
    %765 = vmatpush.bf16.msra.mxu0 %v750
    %766 = vmatpush.bf16.msra.mxu0 %v749
    %767 = vmatpush.bf16.msra.mxu0 %v748
    %768 = vmatpush.bf16.msra.mxu0 %v747
    %769 = vmatpush.bf16.msra.mxu0 %v746
    %770 = vmatmul.bf16.gmra.mxu0 %v695
    %v771 = vpop.f32.mrf.mxu0
    %v772 = vadd.f32 %v713, %v771
    %v773 = vpop.f32.mrf.mxu0
    %774 = vdwg.mxu0
    %v775 = vld [vmem:[%s5 + $0xd] sm:$0x1]
    %v776 = vld [vmem:[%s5 + $0xe] sm:$0x1]
    %v777 = vmul.f32 %v772, %v48
    %v778 = vrot.slane %v777, 4
    %v779 = vadd.f32 %v777, %v778
    %v780 = vrot.slane %v779, 2
    %v781 = vadd.f32 %v779, %v780
    %v782 = vrot.slane %v781, 1
    %v783 = vadd.f32 %v781, %v782
    %v784 = vmul.f32 %v783, %v76
    %v785 = vsub.f32 %v772, %v784
    %v786 = vmul.f32 %v785, %v48
    %v787 = vmul.f32 %v786, %v786
    %v788 = vrot.slane %v787, 4
    %v789 = vadd.f32 %v787, %v788
    %v790 = vrot.slane %v789, 2
    %v791 = vadd.f32 %v789, %v790
    %v792 = vrot.slane %v791, 1
    %v793 = vadd.f32 %v791, %v792
    %v794 = vmul.f32 %v793, %v76
    %v795 = vadd.f32 %v794, 1e-05
    %v796 = vrsqrt.pop %v795
    %v797 = vmul.f32 %v796, %v795
    %v798 = vmul.f32 %v797, %v796
    %v799 = vmul.f32 0.5, %v798
    %v800 = vsub.f32 1.5, %v799
    %v801 = vmul.f32 %v796, %v800
    %vm802 = vweird.f32 %v795
    %vm803 = vweird.f32 %v796
    %vm804 = vmor %vm802, %vm803
    %v805 = vsel %vm804, %v796, %v801
    %v806 = vmul.f32 %v775, %v805
    %v807 = vmul.f32 %v784, %v806
    %v808 = vsub.f32 %v776, %v807
    %v809 = vperm.slane %v806, 0
    %v810 = vmul.f32 %v772, %v809
    %v811 = vperm.slane %v808, 0
    %v812 = vadd.f32 %v810, %v811
    %vm813 = vcmp.ge.f32.partialorder %v653, 0.0
    %v814 = vmul.f32 %v653, 0.2
    %v815 = vsel %vm813, %v653, %v814
    %v816 = vadd.f32 %v815, %v812
    %vm817 = vcmp.ge.f32.partialorder %v816, 0.0
    %v818 = vmul.f32 %v816, 0.2
    %v819 = vsel %vm817, %v816, %v818
    %v820 = vpack.c.bf16 %v819, %v819
    %v821 = vld [vmem:[#allocation3 + $0x18] sm:$0xff]
    %v822 = vld [vmem:[#allocation3 + $0x74] sm:$0xff]
    %v823 = vld [vmem:[#allocation3 + $0xd0] sm:$0xff]
    %v824 = vld [vmem:[#allocation3 + $0x12c] sm:$0xff]
    %v825 = vld [vmem:[#allocation3 + $0x188] sm:$0xff]
    %v826 = vld [vmem:[#allocation3 + $0x1e4] sm:$0xff]
    %v827 = vld [vmem:[#allocation3 + $0x240] sm:$0xff]
    %v828 = vld [vmem:[#allocation3 + $0x29c] sm:$0xff]
    %v829 = vld [vmem:[#allocation3 + $0x2f8] sm:$0xff]
    %v830 = vld [vmem:[#allocation3 + $0x354] sm:$0xff]
    %v831 = vld [vmem:[#allocation3 + $0x3b0] sm:$0xff]
    %v832 = vld [vmem:[#allocation3 + $0x40c] sm:$0xff]
    %v833 = vld [vmem:[#allocation3 + $0x468] sm:$0xff]
    %v834 = vld [vmem:[#allocation3 + $0x4c4] sm:$0xff]
    %v835 = vld [vmem:[#allocation3 + $0x520] sm:$0xff]
    %v836 = vld [vmem:[#allocation3 + $0x57c] sm:$0xff]
    %v853 = vunpack.c.l.b16 %v821
    %v854 = vunpack.c.h.b16 %v821
    %v855 = vunpack.c.l.b16 %v822
    %v856 = vunpack.c.h.b16 %v822
    %v857 = vunpack.c.l.b16 %v823
    %v858 = vunpack.c.h.b16 %v823
    %v859 = vunpack.c.l.b16 %v824
    %v860 = vunpack.c.h.b16 %v824
    %v861 = vunpack.c.l.b16 %v825
    %v862 = vunpack.c.h.b16 %v825
    %v863 = vunpack.c.l.b16 %v826
    %v864 = vunpack.c.h.b16 %v826
    %v865 = vunpack.c.l.b16 %v827
    %v866 = vunpack.c.h.b16 %v827
    %v867 = vunpack.c.l.b16 %v828
    %v868 = vunpack.c.h.b16 %v828
    %v869 = vunpack.c.l.b16 %v829
    %v870 = vunpack.c.h.b16 %v829
    %v871 = vunpack.c.l.b16 %v830
    %v872 = vunpack.c.h.b16 %v830
    %v873 = vunpack.c.l.b16 %v831
    %v874 = vunpack.c.h.b16 %v831
    %v875 = vunpack.c.l.b16 %v832
    %v876 = vunpack.c.h.b16 %v832
    %v877 = vunpack.c.l.b16 %v833
    %v878 = vunpack.c.h.b16 %v833
    %v879 = vunpack.c.l.b16 %v834
    %v880 = vunpack.c.h.b16 %v834
    %v881 = vunpack.c.l.b16 %v835
    %v882 = vunpack.c.h.b16 %v835
    %v883 = vunpack.c.l.b16 %v836
    %v884 = vunpack.c.h.b16 %v836
    %v885 = vpack.c.b16 %v855, %v853
    %v886 = vpack.c.b16 %v856, %v854
    %v887 = vpack.c.b16 %v859, %v857
    %v888 = vpack.c.b16 %v860, %v858
    %v889 = vpack.c.b16 %v863, %v861
    %v890 = vpack.c.b16 %v864, %v862
    %v891 = vpack.c.b16 %v867, %v865
    %v892 = vpack.c.b16 %v868, %v866
    %v893 = vpack.c.b16 %v871, %v869
    %v894 = vpack.c.b16 %v872, %v870
    %v895 = vpack.c.b16 %v875, %v873
    %v896 = vpack.c.b16 %v876, %v874
    %v897 = vpack.c.b16 %v879, %v877
    %v898 = vpack.c.b16 %v880, %v878
    %v899 = vpack.c.b16 %v883, %v881
    %v900 = vpack.c.b16 %v884, %v882
    %917 = vmatpush.bf16.msra.mxu0 %v899
    %918 = vmatpush.bf16.msra.mxu0 %v897
    %919 = vmatpush.bf16.msra.mxu0 %v895
    %920 = vmatpush.bf16.msra.mxu0 %v893
    %921 = vmatpush.bf16.msra.mxu0 %v891
    %922 = vmatpush.bf16.msra.mxu0 %v889
    %923 = vmatpush.bf16.msra.mxu0 %v887
    %924 = vmatpush.bf16.msra.mxu0 %v885
    %925 = vmatmul.bf16.gmra.mxu0 %v820
    %v926 = vpop.f32.mrf.mxu0
    %v927 = vadd.f32 0.0, %v926
    %v928 = vpop.f32.mrf.mxu0
    %929 = vdwg.mxu0
    %930 = vmatpush.bf16.msra.mxu0 %v900
    %931 = vmatpush.bf16.msra.mxu0 %v898
    %932 = vmatpush.bf16.msra.mxu0 %v896
    %933 = vmatpush.bf16.msra.mxu0 %v894
    %934 = vmatpush.bf16.msra.mxu0 %v892
    %935 = vmatpush.bf16.msra.mxu0 %v890
    %936 = vmatpush.bf16.msra.mxu0 %v888
    %937 = vmatpush.bf16.msra.mxu0 %v886
    %938 = vmatmul.bf16.gmra.mxu0 %v820
    %v939 = vpop.f32.mrf.mxu0
    %v940 = vadd.f32 0.0, %v939
    %v941 = vpop.f32.mrf.mxu0
    %942 = vdwg.mxu0
    %v943 = vld [vmem:[%s5 + $0x20] sm:$0x1]
    %v944 = vperm.slane %v943, 0
    %v945 = vadd.f32 %v927, %v944
    %v946 = vld [vmem:[%s5 + $0x21] sm:$0x1]
    %v947 = vperm.slane %v946, 0
    %v948 = vadd.f32 %v940, %v947
    %vm949 = vcmp.gt.f32.partialorder %v948, 20.0
    %v950 = vmin.f32 %v948, 20.0
    %v951 = vmul.f32 %v950, 1.442695
    %v952 = vpow.pop %v951
    %v953 = vadd.f32 %v952, 1.0
    %v954 = vlog2.pop %v953
    %v955 = vmul.f32 %v954, 0.6931472
    %v956 = vmul.f32 -0.5, %v952
    %v957 = vadd.f32 %v956, 1.0
    %v958 = vmul.f32 %v957, %v952
    %v959 = vand.u32 2147483647, %v952
    %vm960 = vcmp.lt.f32.partialorder %v959, 0.0004427343
    %v961 = vsel %vm960, %v958, %v955
    %v962 = vsel %vm949, %v948, %v961
    %v963 = vld [vmem:[%s3] sm:$0xff]
    %v964 = vmul.f32 %v962, %v963
    %v965 = vadd.f32 %v945, %v964
    %v966 = vld [vmem:[%s2] sm:$0xff]
    %v967 = vld [vmem:[%s5 + $0x2] sm:$0x1]
    %v968 = vld [vmem:[%s5 + $0x3] sm:$0x1]
    %v969 = vmul.f32 %v966, %v48
    %v970 = vrot.slane %v969, 4
    %v971 = vadd.f32 %v969, %v970
    %v972 = vrot.slane %v971, 2
    %v973 = vadd.f32 %v971, %v972
    %v974 = vrot.slane %v973, 1
    %v975 = vadd.f32 %v973, %v974
    %v976 = vmul.f32 %v975, %v76
    %v977 = vsub.f32 %v966, %v976
    %v978 = vmul.f32 %v977, %v48
    %v979 = vmul.f32 %v978, %v978
    %v980 = vrot.slane %v979, 4
    %v981 = vadd.f32 %v979, %v980
    %v982 = vrot.slane %v981, 2
    %v983 = vadd.f32 %v981, %v982
    %v984 = vrot.slane %v983, 1
    %v985 = vadd.f32 %v983, %v984
    %v986 = vmul.f32 %v985, %v76
    %v987 = vadd.f32 %v986, 1e-05
    %v988 = vrsqrt.pop %v987
    %v989 = vmul.f32 %v988, %v987
    %v990 = vmul.f32 %v989, %v988
    %v991 = vmul.f32 0.5, %v990
    %v992 = vsub.f32 1.5, %v991
    %v993 = vmul.f32 %v988, %v992
    %vm994 = vweird.f32 %v987
    %vm995 = vweird.f32 %v988
    %vm996 = vmor %vm994, %vm995
    %v997 = vsel %vm996, %v988, %v993
    %v998 = vmul.f32 %v967, %v997
    %v999 = vmul.f32 %v976, %v998
    %v1000 = vsub.f32 %v968, %v999
    %v1001 = vperm.slane %v998, 0
    %v1002 = vmul.f32 %v966, %v1001
    %v1003 = vperm.slane %v1000, 0
    %v1004 = vadd.f32 %v1002, %v1003
    %v1005 = vpack.c.bf16 %v965, %v965
    %v1006 = vld [vmem:[#allocation3 + $0x20] sm:$0xff]
    %v1007 = vld [vmem:[#allocation3 + $0x28] sm:$0xff]
    %v1008 = vld [vmem:[#allocation3 + $0x7c] sm:$0xff]
    %v1009 = vld [vmem:[#allocation3 + $0x84] sm:$0xff]
    %v1010 = vld [vmem:[#allocation3 + $0xd8] sm:$0xff]
    %v1011 = vld [vmem:[#allocation3 + $0xe0] sm:$0xff]
    %v1012 = vld [vmem:[#allocation3 + $0x134] sm:$0xff]
    %v1013 = vld [vmem:[#allocation3 + $0x13c] sm:$0xff]
    %v1014 = vld [vmem:[#allocation3 + $0x190] sm:$0xff]
    %v1015 = vld [vmem:[#allocation3 + $0x198] sm:$0xff]
    %v1016 = vld [vmem:[#allocation3 + $0x1ec] sm:$0xff]
    %v1017 = vld [vmem:[#allocation3 + $0x1f4] sm:$0xff]
    %v1018 = vld [vmem:[#allocation3 + $0x248] sm:$0xff]
    %v1019 = vld [vmem:[#allocation3 + $0x250] sm:$0xff]
    %v1020 = vld [vmem:[#allocation3 + $0x2a4] sm:$0xff]
    %v1021 = vld [vmem:[#allocation3 + $0x2ac] sm:$0xff]
    %v1022 = vld [vmem:[#allocation3 + $0x300] sm:$0xff]
    %v1023 = vld [vmem:[#allocation3 + $0x308] sm:$0xff]
    %v1024 = vld [vmem:[#allocation3 + $0x35c] sm:$0xff]
    %v1025 = vld [vmem:[#allocation3 + $0x364] sm:$0xff]
    %v1026 = vld [vmem:[#allocation3 + $0x3b8] sm:$0xff]
    %v1027 = vld [vmem:[#allocation3 + $0x3c0] sm:$0xff]
    %v1028 = vld [vmem:[#allocation3 + $0x414] sm:$0xff]
    %v1029 = vld [vmem:[#allocation3 + $0x41c] sm:$0xff]
    %v1030 = vld [vmem:[#allocation3 + $0x470] sm:$0xff]
    %v1031 = vld [vmem:[#allocation3 + $0x478] sm:$0xff]
    %v1032 = vld [vmem:[#allocation3 + $0x4cc] sm:$0xff]
    %v1033 = vld [vmem:[#allocation3 + $0x4d4] sm:$0xff]
    %v1034 = vld [vmem:[#allocation3 + $0x528] sm:$0xff]
    %v1035 = vld [vmem:[#allocation3 + $0x530] sm:$0xff]
    %v1036 = vld [vmem:[#allocation3 + $0x584] sm:$0xff]
    %v1037 = vld [vmem:[#allocation3 + $0x58c] sm:$0xff]
    %v1070 = vunpack.c.l.b16 %v1006
    %v1071 = vunpack.c.h.b16 %v1006
    %v1072 = vunpack.c.l.b16 %v1007
    %v1073 = vunpack.c.h.b16 %v1007
    %v1074 = vunpack.c.l.b16 %v1008
    %v1075 = vunpack.c.h.b16 %v1008
    %v1076 = vunpack.c.l.b16 %v1009
    %v1077 = vunpack.c.h.b16 %v1009
    %v1078 = vunpack.c.l.b16 %v1010
    %v1079 = vunpack.c.h.b16 %v1010
    %v1080 = vunpack.c.l.b16 %v1011
    %v1081 = vunpack.c.h.b16 %v1011
    %v1082 = vunpack.c.l.b16 %v1012
    %v1083 = vunpack.c.h.b16 %v1012
    %v1084 = vunpack.c.l.b16 %v1013
    %v1085 = vunpack.c.h.b16 %v1013
    %v1086 = vunpack.c.l.b16 %v1014
    %v1087 = vunpack.c.h.b16 %v1014
    %v1088 = vunpack.c.l.b16 %v1015
    %v1089 = vunpack.c.h.b16 %v1015
    %v1090 = vunpack.c.l.b16 %v1016
    %v1091 = vunpack.c.h.b16 %v1016
    %v1092 = vunpack.c.l.b16 %v1017
    %v1093 = vunpack.c.h.b16 %v1017
    %v1094 = vunpack.c.l.b16 %v1018
    %v1095 = vunpack.c.h.b16 %v1018
    %v1096 = vunpack.c.l.b16 %v1019
    %v1097 = vunpack.c.h.b16 %v1019
    %v1098 = vunpack.c.l.b16 %v1020
    %v1099 = vunpack.c.h.b16 %v1020
    %v1100 = vunpack.c.l.b16 %v1021
    %v1101 = vunpack.c.h.b16 %v1021
    %v1102 = vunpack.c.l.b16 %v1022
    %v1103 = vunpack.c.h.b16 %v1022
    %v1104 = vunpack.c.l.b16 %v1023
    %v1105 = vunpack.c.h.b16 %v1023
    %v1106 = vunpack.c.l.b16 %v1024
    %v1107 = vunpack.c.h.b16 %v1024
    %v1108 = vunpack.c.l.b16 %v1025
    %v1109 = vunpack.c.h.b16 %v1025
    %v1110 = vunpack.c.l.b16 %v1026
    %v1111 = vunpack.c.h.b16 %v1026
    %v1112 = vunpack.c.l.b16 %v1027
    %v1113 = vunpack.c.h.b16 %v1027
    %v1114 = vunpack.c.l.b16 %v1028
    %v1115 = vunpack.c.h.b16 %v1028
    %v1116 = vunpack.c.l.b16 %v1029
    %v1117 = vunpack.c.h.b16 %v1029
    %v1118 = vunpack.c.l.b16 %v1030
    %v1119 = vunpack.c.h.b16 %v1030
    %v1120 = vunpack.c.l.b16 %v1031
    %v1121 = vunpack.c.h.b16 %v1031
    %v1122 = vunpack.c.l.b16 %v1032
    %v1123 = vunpack.c.h.b16 %v1032
    %v1124 = vunpack.c.l.b16 %v1033
    %v1125 = vunpack.c.h.b16 %v1033
    %v1126 = vunpack.c.l.b16 %v1034
    %v1127 = vunpack.c.h.b16 %v1034
    %v1128 = vunpack.c.l.b16 %v1035
    %v1129 = vunpack.c.h.b16 %v1035
    %v1130 = vunpack.c.l.b16 %v1036
    %v1131 = vunpack.c.h.b16 %v1036
    %v1132 = vunpack.c.l.b16 %v1037
    %v1133 = vunpack.c.h.b16 %v1037
    %v1134 = vpack.c.b16 %v1074, %v1070
    %v1135 = vpack.c.b16 %v1075, %v1071
    %v1136 = vpack.c.b16 %v1076, %v1072
    %v1137 = vpack.c.b16 %v1077, %v1073
    %v1138 = vpack.c.b16 %v1082, %v1078
    %v1139 = vpack.c.b16 %v1083, %v1079
    %v1140 = vpack.c.b16 %v1084, %v1080
    %v1141 = vpack.c.b16 %v1085, %v1081
    %v1142 = vpack.c.b16 %v1090, %v1086
    %v1143 = vpack.c.b16 %v1091, %v1087
    %v1144 = vpack.c.b16 %v1092, %v1088
    %v1145 = vpack.c.b16 %v1093, %v1089
    %v1146 = vpack.c.b16 %v1098, %v1094
    %v1147 = vpack.c.b16 %v1099, %v1095
    %v1148 = vpack.c.b16 %v1100, %v1096
    %v1149 = vpack.c.b16 %v1101, %v1097
    %v1150 = vpack.c.b16 %v1106, %v1102
    %v1151 = vpack.c.b16 %v1107, %v1103
    %v1152 = vpack.c.b16 %v1108, %v1104
    %v1153 = vpack.c.b16 %v1109, %v1105
    %v1154 = vpack.c.b16 %v1114, %v1110
    %v1155 = vpack.c.b16 %v1115, %v1111
    %v1156 = vpack.c.b16 %v1116, %v1112
    %v1157 = vpack.c.b16 %v1117, %v1113
    %v1158 = vpack.c.b16 %v1122, %v1118
    %v1159 = vpack.c.b16 %v1123, %v1119
    %v1160 = vpack.c.b16 %v1124, %v1120
    %v1161 = vpack.c.b16 %v1125, %v1121
    %v1162 = vpack.c.b16 %v1130, %v1126
    %v1163 = vpack.c.b16 %v1131, %v1127
    %v1164 = vpack.c.b16 %v1132, %v1128
    %v1165 = vpack.c.b16 %v1133, %v1129
    %1198 = vmatpush.bf16.msra.mxu0 %v1162
    %1199 = vmatpush.bf16.msra.mxu0 %v1158
    %1200 = vmatpush.bf16.msra.mxu0 %v1154
    %1201 = vmatpush.bf16.msra.mxu0 %v1150
    %1202 = vmatpush.bf16.msra.mxu0 %v1146
    %1203 = vmatpush.bf16.msra.mxu0 %v1142
    %1204 = vmatpush.bf16.msra.mxu0 %v1138
    %1205 = vmatpush.bf16.msra.mxu0 %v1134
    %1206 = vmatmul.bf16.gmra.mxu0 %v1005
    %v1207 = vpop.f32.mrf.mxu0
    %v1208 = vadd.f32 0.0, %v1207
    %v1209 = vpop.f32.mrf.mxu0
    %1210 = vdwg.mxu0
    %1211 = vmatpush.bf16.msra.mxu0 %v1163
    %1212 = vmatpush.bf16.msra.mxu0 %v1159
    %1213 = vmatpush.bf16.msra.mxu0 %v1155
    %1214 = vmatpush.bf16.msra.mxu0 %v1151
    %1215 = vmatpush.bf16.msra.mxu0 %v1147
    %1216 = vmatpush.bf16.msra.mxu0 %v1143
    %1217 = vmatpush.bf16.msra.mxu0 %v1139
    %1218 = vmatpush.bf16.msra.mxu0 %v1135
    %1219 = vmatmul.bf16.gmra.mxu0 %v1005
    %v1220 = vpop.f32.mrf.mxu0
    %v1221 = vadd.f32 0.0, %v1220
    %v1222 = vpop.f32.mrf.mxu0
    %1223 = vdwg.mxu0
    %1224 = vmatpush.bf16.msra.mxu0 %v1164
    %1225 = vmatpush.bf16.msra.mxu0 %v1160
    %1226 = vmatpush.bf16.msra.mxu0 %v1156
    %1227 = vmatpush.bf16.msra.mxu0 %v1152
    %1228 = vmatpush.bf16.msra.mxu0 %v1148
    %1229 = vmatpush.bf16.msra.mxu0 %v1144
    %1230 = vmatpush.bf16.msra.mxu0 %v1140
    %1231 = vmatpush.bf16.msra.mxu0 %v1136
    %1232 = vmatmul.bf16.gmra.mxu0 %v1005
    %v1233 = vpop.f32.mrf.mxu0
    %v1234 = vadd.f32 0.0, %v1233
    %v1235 = vpop.f32.mrf.mxu0
    %1236 = vdwg.mxu0
    %1237 = vmatpush.bf16.msra.mxu0 %v1165
    %1238 = vmatpush.bf16.msra.mxu0 %v1161
    %1239 = vmatpush.bf16.msra.mxu0 %v1157
    %1240 = vmatpush.bf16.msra.mxu0 %v1153
    %1241 = vmatpush.bf16.msra.mxu0 %v1149
    %1242 = vmatpush.bf16.msra.mxu0 %v1145
    %1243 = vmatpush.bf16.msra.mxu0 %v1141
    %1244 = vmatpush.bf16.msra.mxu0 %v1137
    %1245 = vmatmul.bf16.gmra.mxu0 %v1005
    %v1246 = vpop.f32.mrf.mxu0
    %v1247 = vadd.f32 0.0, %v1246
    %v1248 = vpop.f32.mrf.mxu0
    %1249 = vdwg.mxu0
    %v1250 = vpack.c.bf16 %v1004, %v1004
    %v1251 = vld [vmem:[#allocation3 + $0x30] sm:$0xff]
    %v1252 = vld [vmem:[#allocation3 + $0x38] sm:$0xff]
    %v1253 = vld [vmem:[#allocation3 + $0x8c] sm:$0xff]
    %v1254 = vld [vmem:[#allocation3 + $0x94] sm:$0xff]
    %v1255 = vld [vmem:[#allocation3 + $0xe8] sm:$0xff]
    %v1256 = vld [vmem:[#allocation3 + $0xf0] sm:$0xff]
    %v1257 = vld [vmem:[#allocation3 + $0x144] sm:$0xff]
    %v1258 = vld [vmem:[#allocation3 + $0x14c] sm:$0xff]
    %v1259 = vld [vmem:[#allocation3 + $0x1a0] sm:$0xff]
    %v1260 = vld [vmem:[#allocation3 + $0x1a8] sm:$0xff]
    %v1261 = vld [vmem:[#allocation3 + $0x1fc] sm:$0xff]
    %v1262 = vld [vmem:[#allocation3 + $0x204] sm:$0xff]
    %v1263 = vld [vmem:[#allocation3 + $0x258] sm:$0xff]
    %v1264 = vld [vmem:[#allocation3 + $0x260] sm:$0xff]
    %v1265 = vld [vmem:[#allocation3 + $0x2b4] sm:$0xff]
    %v1266 = vld [vmem:[#allocation3 + $0x2bc] sm:$0xff]
    %v1267 = vld [vmem:[#allocation3 + $0x310] sm:$0xff]
    %v1268 = vld [vmem:[#allocation3 + $0x318] sm:$0xff]
    %v1269 = vld [vmem:[#allocation3 + $0x36c] sm:$0xff]
    %v1270 = vld [vmem:[#allocation3 + $0x374] sm:$0xff]
    %v1271 = vld [vmem:[#allocation3 + $0x3c8] sm:$0xff]
    %v1272 = vld [vmem:[#allocation3 + $0x3d0] sm:$0xff]
    %v1273 = vld [vmem:[#allocation3 + $0x424] sm:$0xff]
    %v1274 = vld [vmem:[#allocation3 + $0x42c] sm:$0xff]
    %v1275 = vld [vmem:[#allocation3 + $0x480] sm:$0xff]
    %v1276 = vld [vmem:[#allocation3 + $0x488] sm:$0xff]
    %v1277 = vld [vmem:[#allocation3 + $0x4dc] sm:$0xff]
    %v1278 = vld [vmem:[#allocation3 + $0x4e4] sm:$0xff]
    %v1279 = vld [vmem:[#allocation3 + $0x538] sm:$0xff]
    %v1280 = vld [vmem:[#allocation3 + $0x540] sm:$0xff]
    %v1281 = vld [vmem:[#allocation3 + $0x594] sm:$0xff]
    %v1282 = vld [vmem:[#allocation3 + $0x59c] sm:$0xff]
    %v1315 = vunpack.c.l.b16 %v1251
    %v1316 = vunpack.c.h.b16 %v1251
    %v1317 = vunpack.c.l.b16 %v1252
    %v1318 = vunpack.c.h.b16 %v1252
    %v1319 = vunpack.c.l.b16 %v1253
    %v1320 = vunpack.c.h.b16 %v1253
    %v1321 = vunpack.c.l.b16 %v1254
    %v1322 = vunpack.c.h.b16 %v1254
    %v1323 = vunpack.c.l.b16 %v1255
    %v1324 = vunpack.c.h.b16 %v1255
    %v1325 = vunpack.c.l.b16 %v1256
    %v1326 = vunpack.c.h.b16 %v1256
    %v1327 = vunpack.c.l.b16 %v1257
    %v1328 = vunpack.c.h.b16 %v1257
    %v1329 = vunpack.c.l.b16 %v1258
    %v1330 = vunpack.c.h.b16 %v1258
    %v1331 = vunpack.c.l.b16 %v1259
    %v1332 = vunpack.c.h.b16 %v1259
    %v1333 = vunpack.c.l.b16 %v1260
    %v1334 = vunpack.c.h.b16 %v1260
    %v1335 = vunpack.c.l.b16 %v1261
    %v1336 = vunpack.c.h.b16 %v1261
    %v1337 = vunpack.c.l.b16 %v1262
    %v1338 = vunpack.c.h.b16 %v1262
    %v1339 = vunpack.c.l.b16 %v1263
    %v1340 = vunpack.c.h.b16 %v1263
    %v1341 = vunpack.c.l.b16 %v1264
    %v1342 = vunpack.c.h.b16 %v1264
    %v1343 = vunpack.c.l.b16 %v1265
    %v1344 = vunpack.c.h.b16 %v1265
    %v1345 = vunpack.c.l.b16 %v1266
    %v1346 = vunpack.c.h.b16 %v1266
    %v1347 = vunpack.c.l.b16 %v1267
    %v1348 = vunpack.c.h.b16 %v1267
    %v1349 = vunpack.c.l.b16 %v1268
    %v1350 = vunpack.c.h.b16 %v1268
    %v1351 = vunpack.c.l.b16 %v1269
    %v1352 = vunpack.c.h.b16 %v1269
    %v1353 = vunpack.c.l.b16 %v1270
    %v1354 = vunpack.c.h.b16 %v1270
    %v1355 = vunpack.c.l.b16 %v1271
    %v1356 = vunpack.c.h.b16 %v1271
    %v1357 = vunpack.c.l.b16 %v1272
    %v1358 = vunpack.c.h.b16 %v1272
    %v1359 = vunpack.c.l.b16 %v1273
    %v1360 = vunpack.c.h.b16 %v1273
    %v1361 = vunpack.c.l.b16 %v1274
    %v1362 = vunpack.c.h.b16 %v1274
    %v1363 = vunpack.c.l.b16 %v1275
    %v1364 = vunpack.c.h.b16 %v1275
    %v1365 = vunpack.c.l.b16 %v1276
    %v1366 = vunpack.c.h.b16 %v1276
    %v1367 = vunpack.c.l.b16 %v1277
    %v1368 = vunpack.c.h.b16 %v1277
    %v1369 = vunpack.c.l.b16 %v1278
    %v1370 = vunpack.c.h.b16 %v1278
    %v1371 = vunpack.c.l.b16 %v1279
    %v1372 = vunpack.c.h.b16 %v1279
    %v1373 = vunpack.c.l.b16 %v1280
    %v1374 = vunpack.c.h.b16 %v1280
    %v1375 = vunpack.c.l.b16 %v1281
    %v1376 = vunpack.c.h.b16 %v1281
    %v1377 = vunpack.c.l.b16 %v1282
    %v1378 = vunpack.c.h.b16 %v1282
    %v1379 = vpack.c.b16 %v1319, %v1315
    %v1380 = vpack.c.b16 %v1320, %v1316
    %v1381 = vpack.c.b16 %v1321, %v1317
    %v1382 = vpack.c.b16 %v1322, %v1318
    %v1383 = vpack.c.b16 %v1327, %v1323
    %v1384 = vpack.c.b16 %v1328, %v1324
    %v1385 = vpack.c.b16 %v1329, %v1325
    %v1386 = vpack.c.b16 %v1330, %v1326
    %v1387 = vpack.c.b16 %v1335, %v1331
    %v1388 = vpack.c.b16 %v1336, %v1332
    %v1389 = vpack.c.b16 %v1337, %v1333
    %v1390 = vpack.c.b16 %v1338, %v1334
    %v1391 = vpack.c.b16 %v1343, %v1339
    %v1392 = vpack.c.b16 %v1344, %v1340
    %v1393 = vpack.c.b16 %v1345, %v1341
    %v1394 = vpack.c.b16 %v1346, %v1342
    %v1395 = vpack.c.b16 %v1351, %v1347
    %v1396 = vpack.c.b16 %v1352, %v1348
    %v1397 = vpack.c.b16 %v1353, %v1349
    %v1398 = vpack.c.b16 %v1354, %v1350
    %v1399 = vpack.c.b16 %v1359, %v1355
    %v1400 = vpack.c.b16 %v1360, %v1356
    %v1401 = vpack.c.b16 %v1361, %v1357
    %v1402 = vpack.c.b16 %v1362, %v1358
    %v1403 = vpack.c.b16 %v1367, %v1363
    %v1404 = vpack.c.b16 %v1368, %v1364
    %v1405 = vpack.c.b16 %v1369, %v1365
    %v1406 = vpack.c.b16 %v1370, %v1366
    %v1407 = vpack.c.b16 %v1375, %v1371
    %v1408 = vpack.c.b16 %v1376, %v1372
    %v1409 = vpack.c.b16 %v1377, %v1373
    %v1410 = vpack.c.b16 %v1378, %v1374
    %1443 = vmatpush.bf16.msra.mxu0 %v1407
    %1444 = vmatpush.bf16.msra.mxu0 %v1403
    %1445 = vmatpush.bf16.msra.mxu0 %v1399
    %1446 = vmatpush.bf16.msra.mxu0 %v1395
    %1447 = vmatpush.bf16.msra.mxu0 %v1391
    %1448 = vmatpush.bf16.msra.mxu0 %v1387
    %1449 = vmatpush.bf16.msra.mxu0 %v1383
    %1450 = vmatpush.bf16.msra.mxu0 %v1379
    %1451 = vmatmul.bf16.gmra.mxu0 %v1250
    %v1452 = vpop.f32.mrf.mxu0
    %v1453 = vadd.f32 0.0, %v1452
    %v1454 = vpop.f32.mrf.mxu0
    %1455 = vdwg.mxu0
    %1456 = vmatpush.bf16.msra.mxu0 %v1408
    %1457 = vmatpush.bf16.msra.mxu0 %v1404
    %1458 = vmatpush.bf16.msra.mxu0 %v1400
    %1459 = vmatpush.bf16.msra.mxu0 %v1396
    %1460 = vmatpush.bf16.msra.mxu0 %v1392
    %1461 = vmatpush.bf16.msra.mxu0 %v1388
    %1462 = vmatpush.bf16.msra.mxu0 %v1384
    %1463 = vmatpush.bf16.msra.mxu0 %v1380
    %1464 = vmatmul.bf16.gmra.mxu0 %v1250
    %v1465 = vpop.f32.mrf.mxu0
    %v1466 = vadd.f32 0.0, %v1465
    %v1467 = vpop.f32.mrf.mxu0
    %1468 = vdwg.mxu0
    %1469 = vmatpush.bf16.msra.mxu0 %v1409
    %1470 = vmatpush.bf16.msra.mxu0 %v1405
    %1471 = vmatpush.bf16.msra.mxu0 %v1401
    %1472 = vmatpush.bf16.msra.mxu0 %v1397
    %1473 = vmatpush.bf16.msra.mxu0 %v1393
    %1474 = vmatpush.bf16.msra.mxu0 %v1389
    %1475 = vmatpush.bf16.msra.mxu0 %v1385
    %1476 = vmatpush.bf16.msra.mxu0 %v1381
    %1477 = vmatmul.bf16.gmra.mxu0 %v1250
    %v1478 = vpop.f32.mrf.mxu0
    %v1479 = vadd.f32 0.0, %v1478
    %v1480 = vpop.f32.mrf.mxu0
    %1481 = vdwg.mxu0
    %1482 = vmatpush.bf16.msra.mxu0 %v1410
    %1483 = vmatpush.bf16.msra.mxu0 %v1406
    %1484 = vmatpush.bf16.msra.mxu0 %v1402
    %1485 = vmatpush.bf16.msra.mxu0 %v1398
    %1486 = vmatpush.bf16.msra.mxu0 %v1394
    %1487 = vmatpush.bf16.msra.mxu0 %v1390
    %1488 = vmatpush.bf16.msra.mxu0 %v1386
    %1489 = vmatpush.bf16.msra.mxu0 %v1382
    %1490 = vmatmul.bf16.gmra.mxu0 %v1250
    %v1491 = vpop.f32.mrf.mxu0
    %v1492 = vadd.f32 0.0, %v1491
    %v1493 = vpop.f32.mrf.mxu0
    %1494 = vdwg.mxu0
    %v1495 = vadd.f32 %v1208, %v1453
    %v1496 = vld [vmem:[%s5 + $0x16] sm:$0x1]
    %v1497 = vperm.slane %v1496, 0
    %v1498 = vadd.f32 %v1495, %v1497
    %v1499 = vadd.f32 %v1221, %v1466
    %v1500 = vld [vmem:[%s5 + $0x18] sm:$0x1]
    %v1501 = vperm.slane %v1500, 0
    %v1502 = vadd.f32 %v1499, %v1501
    %v1503 = vadd.f32 %v1234, %v1479
    %v1504 = vadd.f32 %v1247, %v1492
    %v1505 = vld [vmem:[%s5 + $0x12] sm:$0x1]
    %v1506 = vld [vmem:[%s5 + $0x13] sm:$0x1]
    %v1507 = vmul.f32 %v1498, %v48
    %v1508 = vrot.slane %v1507, 4
    %v1509 = vadd.f32 %v1507, %v1508
    %v1510 = vrot.slane %v1509, 2
    %v1511 = vadd.f32 %v1509, %v1510
    %v1512 = vrot.slane %v1511, 1
    %v1513 = vadd.f32 %v1511, %v1512
    %v1514 = vmul.f32 %v1513, %v76
    %v1515 = vsub.f32 %v1498, %v1514
    %v1516 = vmul.f32 %v1515, %v48
    %v1517 = vmul.f32 %v1516, %v1516
    %v1518 = vrot.slane %v1517, 4
    %v1519 = vadd.f32 %v1517, %v1518
    %v1520 = vrot.slane %v1519, 2
    %v1521 = vadd.f32 %v1519, %v1520
    %v1522 = vrot.slane %v1521, 1
    %v1523 = vadd.f32 %v1521, %v1522
    %v1524 = vmul.f32 %v1523, %v76
    %v1525 = vadd.f32 %v1524, 1e-05
    %v1526 = vrsqrt.pop %v1525
    %v1527 = vmul.f32 %v1526, %v1525
    %v1528 = vmul.f32 %v1527, %v1526
    %v1529 = vmul.f32 0.5, %v1528
    %v1530 = vsub.f32 1.5, %v1529
    %v1531 = vmul.f32 %v1526, %v1530
    %vm1532 = vweird.f32 %v1525
    %vm1533 = vweird.f32 %v1526
    %vm1534 = vmor %vm1532, %vm1533
    %v1535 = vsel %vm1534, %v1526, %v1531
    %v1536 = vmul.f32 %v1505, %v1535
    %v1537 = vmul.f32 %v1514, %v1536
    %v1538 = vsub.f32 %v1506, %v1537
    %v1539 = vperm.slane %v1536, 0
    %v1540 = vmul.f32 %v1498, %v1539
    %v1541 = vperm.slane %v1538, 0
    %v1542 = vadd.f32 %v1540, %v1541
    %vm1543 = vcmp.ge.f32.partialorder %v1542, 0.0
    %v1544 = vmul.f32 %v1542, 0.2
    %v1545 = vsel %vm1543, %v1542, %v1544
    %v1546 = vpack.c.bf16 %v1545, %v1545
    %v1547 = vld [vmem:[#allocation3 + $0x54] sm:$0xf]
    %v1548 = vld [vmem:[#allocation3 + $0xb0] sm:$0xf]
    %v1549 = vld [vmem:[#allocation3 + $0x10c] sm:$0xf]
    %v1550 = vld [vmem:[#allocation3 + $0x168] sm:$0xf]
    %v1551 = vld [vmem:[#allocation3 + $0x1c4] sm:$0xf]
    %v1552 = vld [vmem:[#allocation3 + $0x220] sm:$0xf]
    %v1553 = vld [vmem:[#allocation3 + $0x27c] sm:$0xf]
    %v1554 = vld [vmem:[#allocation3 + $0x2d8] sm:$0xf]
    %v1555 = vld [vmem:[#allocation3 + $0x334] sm:$0xf]
    %v1556 = vld [vmem:[#allocation3 + $0x390] sm:$0xf]
    %v1557 = vld [vmem:[#allocation3 + $0x3ec] sm:$0xf]
    %v1558 = vld [vmem:[#allocation3 + $0x448] sm:$0xf]
    %v1559 = vld [vmem:[#allocation3 + $0x4a4] sm:$0xf]
    %v1560 = vld [vmem:[#allocation3 + $0x500] sm:$0xf]
    %v1561 = vld [vmem:[#allocation3 + $0x55c] sm:$0xf]
    %v1562 = vld [vmem:[#allocation3 + $0x5b8] sm:$0xf]
    %v1563 = vld [vmem:[%s5 + $0x17] sm:$0x1]
    %v1564 = vperm.slane %v1563, 0
    %v1581 = vunpack.c.l.b16 %v1547
    %v1582 = vunpack.c.l.b16 %v1548
    %v1583 = vunpack.c.l.b16 %v1549
    %v1584 = vunpack.c.l.b16 %v1550
    %v1585 = vunpack.c.l.b16 %v1551
    %v1586 = vunpack.c.l.b16 %v1552
    %v1587 = vunpack.c.l.b16 %v1553
    %v1588 = vunpack.c.l.b16 %v1554
    %v1589 = vunpack.c.l.b16 %v1555
    %v1590 = vunpack.c.l.b16 %v1556
    %v1591 = vunpack.c.l.b16 %v1557
    %v1592 = vunpack.c.l.b16 %v1558
    %v1593 = vunpack.c.l.b16 %v1559
    %v1594 = vunpack.c.l.b16 %v1560
    %v1595 = vunpack.c.l.b16 %v1561
    %v1596 = vunpack.c.l.b16 %v1562
    %v1597 = vpack.c.b16 %v1582, %v1581
    %v1598 = vpack.c.b16 %v1584, %v1583
    %v1599 = vpack.c.b16 %v1586, %v1585
    %v1600 = vpack.c.b16 %v1588, %v1587
    %v1601 = vpack.c.b16 %v1590, %v1589
    %v1602 = vpack.c.b16 %v1592, %v1591
    %v1603 = vpack.c.b16 %v1594, %v1593
    %v1604 = vpack.c.b16 %v1596, %v1595
    %1613 = vmatpush.bf16.msra.mxu0 %v1604
    %1614 = vmatpush.bf16.msra.mxu0 %v1603
    %1615 = vmatpush.bf16.msra.mxu0 %v1602
    %1616 = vmatpush.bf16.msra.mxu0 %v1601
    %1617 = vmatpush.bf16.msra.mxu0 %v1600
    %1618 = vmatpush.bf16.msra.mxu0 %v1599
    %1619 = vmatpush.bf16.msra.mxu0 %v1598
    %1620 = vmatpush.bf16.msra.mxu0 %v1597
    %1621 = vmatmul.bf16.gmra.mxu0 %v1546
    %v1622 = vpop.f32.mrf.mxu0
    %v1623 = vadd.f32 %v1564, %v1622
    %v1624 = vpop.f32.mrf.mxu0
    %1625 = vdwg.mxu0
    %v1626 = vld [vmem:[%s5 + $0x14] sm:$0x1]
    %v1627 = vld [vmem:[%s5 + $0x15] sm:$0x1]
    %v1628 = vmul.f32 %v1623, %v48
    %v1629 = vrot.slane %v1628, 4
    %v1630 = vadd.f32 %v1628, %v1629
    %v1631 = vrot.slane %v1630, 2
    %v1632 = vadd.f32 %v1630, %v1631
    %v1633 = vrot.slane %v1632, 1
    %v1634 = vadd.f32 %v1632, %v1633
    %v1635 = vmul.f32 %v1634, %v76
    %v1636 = vsub.f32 %v1623, %v1635
    %v1637 = vmul.f32 %v1636, %v48
    %v1638 = vmul.f32 %v1637, %v1637
    %v1639 = vrot.slane %v1638, 4
    %v1640 = vadd.f32 %v1638, %v1639
    %v1641 = vrot.slane %v1640, 2
    %v1642 = vadd.f32 %v1640, %v1641
    %v1643 = vrot.slane %v1642, 1
    %v1644 = vadd.f32 %v1642, %v1643
    %v1645 = vmul.f32 %v1644, %v76
    %v1646 = vadd.f32 %v1645, 1e-05
    %v1647 = vrsqrt.pop %v1646
    %v1648 = vmul.f32 %v1647, %v1646
    %v1649 = vmul.f32 %v1648, %v1647
    %v1650 = vmul.f32 0.5, %v1649
    %v1651 = vsub.f32 1.5, %v1650
    %v1652 = vmul.f32 %v1647, %v1651
    %vm1653 = vweird.f32 %v1646
    %vm1654 = vweird.f32 %v1647
    %vm1655 = vmor %vm1653, %vm1654
    %v1656 = vsel %vm1655, %v1647, %v1652
    %v1657 = vmul.f32 %v1626, %v1656
    %v1658 = vmul.f32 %v1635, %v1657
    %v1659 = vsub.f32 %v1627, %v1658
    %v1660 = vperm.slane %v1657, 0
    %v1661 = vmul.f32 %v1623, %v1660
    %v1662 = vperm.slane %v1659, 0
    %v1663 = vadd.f32 %v1661, %v1662
    %vm1664 = vcmp.ge.f32.partialorder %v1502, 0.0
    %v1665 = vmul.f32 %v1502, 0.2
    %v1666 = vsel %vm1664, %v1502, %v1665
    %v1667 = vadd.f32 %v1666, %v1663
    %vm1668 = vcmp.ge.f32.partialorder %v1667, 0.0
    %v1669 = vmul.f32 %v1667, 0.2
    %v1670 = vsel %vm1668, %v1667, %v1669
    %v1671 = vpack.c.bf16 %v1670, %v1670
    %v1672 = vld [vmem:[#allocation3 + $0x40] sm:$0xff]
    %v1673 = vld [vmem:[#allocation3 + $0x9c] sm:$0xff]
    %v1674 = vld [vmem:[#allocation3 + $0xf8] sm:$0xff]
    %v1675 = vld [vmem:[#allocation3 + $0x154] sm:$0xff]
    %v1676 = vld [vmem:[#allocation3 + $0x1b0] sm:$0xff]
    %v1677 = vld [vmem:[#allocation3 + $0x20c] sm:$0xff]
    %v1678 = vld [vmem:[#allocation3 + $0x268] sm:$0xff]
    %v1679 = vld [vmem:[#allocation3 + $0x2c4] sm:$0xff]
    %v1680 = vld [vmem:[#allocation3 + $0x320] sm:$0xff]
    %v1681 = vld [vmem:[#allocation3 + $0x37c] sm:$0xff]
    %v1682 = vld [vmem:[#allocation3 + $0x3d8] sm:$0xff]
    %v1683 = vld [vmem:[#allocation3 + $0x434] sm:$0xff]
    %v1684 = vld [vmem:[#allocation3 + $0x490] sm:$0xff]
    %v1685 = vld [vmem:[#allocation3 + $0x4ec] sm:$0xff]
    %v1686 = vld [vmem:[#allocation3 + $0x548] sm:$0xff]
    %v1687 = vld [vmem:[#allocation3 + $0x5a4] sm:$0xff]
    %v1704 = vunpack.c.l.b16 %v1672
    %v1705 = vunpack.c.h.b16 %v1672
    %v1706 = vunpack.c.l.b16 %v1673
    %v1707 = vunpack.c.h.b16 %v1673
    %v1708 = vunpack.c.l.b16 %v1674
    %v1709 = vunpack.c.h.b16 %v1674
    %v1710 = vunpack.c.l.b16 %v1675
    %v1711 = vunpack.c.h.b16 %v1675
    %v1712 = vunpack.c.l.b16 %v1676
    %v1713 = vunpack.c.h.b16 %v1676
    %v1714 = vunpack.c.l.b16 %v1677
    %v1715 = vunpack.c.h.b16 %v1677
    %v1716 = vunpack.c.l.b16 %v1678
    %v1717 = vunpack.c.h.b16 %v1678
    %v1718 = vunpack.c.l.b16 %v1679
    %v1719 = vunpack.c.h.b16 %v1679
    %v1720 = vunpack.c.l.b16 %v1680
    %v1721 = vunpack.c.h.b16 %v1680
    %v1722 = vunpack.c.l.b16 %v1681
    %v1723 = vunpack.c.h.b16 %v1681
    %v1724 = vunpack.c.l.b16 %v1682
    %v1725 = vunpack.c.h.b16 %v1682
    %v1726 = vunpack.c.l.b16 %v1683
    %v1727 = vunpack.c.h.b16 %v1683
    %v1728 = vunpack.c.l.b16 %v1684
    %v1729 = vunpack.c.h.b16 %v1684
    %v1730 = vunpack.c.l.b16 %v1685
    %v1731 = vunpack.c.h.b16 %v1685
    %v1732 = vunpack.c.l.b16 %v1686
    %v1733 = vunpack.c.h.b16 %v1686
    %v1734 = vunpack.c.l.b16 %v1687
    %v1735 = vunpack.c.h.b16 %v1687
    %v1736 = vpack.c.b16 %v1706, %v1704
    %v1737 = vpack.c.b16 %v1707, %v1705
    %v1738 = vpack.c.b16 %v1710, %v1708
    %v1739 = vpack.c.b16 %v1711, %v1709
    %v1740 = vpack.c.b16 %v1714, %v1712
    %v1741 = vpack.c.b16 %v1715, %v1713
    %v1742 = vpack.c.b16 %v1718, %v1716
    %v1743 = vpack.c.b16 %v1719, %v1717
    %v1744 = vpack.c.b16 %v1722, %v1720
    %v1745 = vpack.c.b16 %v1723, %v1721
    %v1746 = vpack.c.b16 %v1726, %v1724
    %v1747 = vpack.c.b16 %v1727, %v1725
    %v1748 = vpack.c.b16 %v1730, %v1728
    %v1749 = vpack.c.b16 %v1731, %v1729
    %v1750 = vpack.c.b16 %v1734, %v1732
    %v1751 = vpack.c.b16 %v1735, %v1733
    %1768 = vmatpush.bf16.msra.mxu0 %v1750
    %1769 = vmatpush.bf16.msra.mxu0 %v1748
    %1770 = vmatpush.bf16.msra.mxu0 %v1746
    %1771 = vmatpush.bf16.msra.mxu0 %v1744
    %1772 = vmatpush.bf16.msra.mxu0 %v1742
    %1773 = vmatpush.bf16.msra.mxu0 %v1740
    %1774 = vmatpush.bf16.msra.mxu0 %v1738
    %1775 = vmatpush.bf16.msra.mxu0 %v1736
    %1776 = vmatmul.bf16.gmra.mxu0 %v1671
    %v1777 = vpop.f32.mrf.mxu0
    %v1778 = vadd.f32 0.0, %v1777
    %v1779 = vpop.f32.mrf.mxu0
    %1780 = vdwg.mxu0
    %1781 = vmatpush.bf16.msra.mxu0 %v1751
    %1782 = vmatpush.bf16.msra.mxu0 %v1749
    %1783 = vmatpush.bf16.msra.mxu0 %v1747
    %1784 = vmatpush.bf16.msra.mxu0 %v1745
    %1785 = vmatpush.bf16.msra.mxu0 %v1743
    %1786 = vmatpush.bf16.msra.mxu0 %v1741
    %1787 = vmatpush.bf16.msra.mxu0 %v1739
    %1788 = vmatpush.bf16.msra.mxu0 %v1737
    %1789 = vmatmul.bf16.gmra.mxu0 %v1671
    %v1790 = vpop.f32.mrf.mxu0
    %v1791 = vadd.f32 0.0, %v1790
    %v1792 = vpop.f32.mrf.mxu0
    %1793 = vdwg.mxu0
    %v1794 = vadd.f32 %v1503, %v1778
    %v1795 = vld [vmem:[%s5 + $0x1d] sm:$0x1]
    %v1796 = vperm.slane %v1795, 0
    %v1797 = vadd.f32 %v1794, %v1796
    %v1798 = vadd.f32 %v1504, %v1791
    %v1799 = vld [vmem:[%s5 + $0x1f] sm:$0x1]
    %v1800 = vperm.slane %v1799, 0
    %v1801 = vadd.f32 %v1798, %v1800
    %v1802 = vld [vmem:[%s5 + $0x19] sm:$0x1]
    %v1803 = vld [vmem:[%s5 + $0x1a] sm:$0x1]
    %v1804 = vmul.f32 %v1797, %v48
    %v1805 = vrot.slane %v1804, 4
    %v1806 = vadd.f32 %v1804, %v1805
    %v1807 = vrot.slane %v1806, 2
    %v1808 = vadd.f32 %v1806, %v1807
    %v1809 = vrot.slane %v1808, 1
    %v1810 = vadd.f32 %v1808, %v1809
    %v1811 = vmul.f32 %v1810, %v76
    %v1812 = vsub.f32 %v1797, %v1811
    %v1813 = vmul.f32 %v1812, %v48
    %v1814 = vmul.f32 %v1813, %v1813
    %v1815 = vrot.slane %v1814, 4
    %v1816 = vadd.f32 %v1814, %v1815
    %v1817 = vrot.slane %v1816, 2
    %v1818 = vadd.f32 %v1816, %v1817
    %v1819 = vrot.slane %v1818, 1
    %v1820 = vadd.f32 %v1818, %v1819
    %v1821 = vmul.f32 %v1820, %v76
    %v1822 = vadd.f32 %v1821, 1e-05
    %v1823 = vrsqrt.pop %v1822
    %v1824 = vmul.f32 %v1823, %v1822
    %v1825 = vmul.f32 %v1824, %v1823
    %v1826 = vmul.f32 0.5, %v1825
    %v1827 = vsub.f32 1.5, %v1826
    %v1828 = vmul.f32 %v1823, %v1827
    %vm1829 = vweird.f32 %v1822
    %vm1830 = vweird.f32 %v1823
    %vm1831 = vmor %vm1829, %vm1830
    %v1832 = vsel %vm1831, %v1823, %v1828
    %v1833 = vmul.f32 %v1802, %v1832
    %v1834 = vmul.f32 %v1811, %v1833
    %v1835 = vsub.f32 %v1803, %v1834
    %v1836 = vperm.slane %v1833, 0
    %v1837 = vmul.f32 %v1797, %v1836
    %v1838 = vperm.slane %v1835, 0
    %v1839 = vadd.f32 %v1837, %v1838
    %vm1840 = vcmp.ge.f32.partialorder %v1839, 0.0
    %v1841 = vmul.f32 %v1839, 0.2
    %v1842 = vsel %vm1840, %v1839, %v1841
    %v1843 = vpack.c.bf16 %v1842, %v1842
    %v1844 = vld [vmem:[#allocation3 + $0x58] sm:$0xf]
    %v1845 = vld [vmem:[#allocation3 + $0xb4] sm:$0xf]
    %v1846 = vld [vmem:[#allocation3 + $0x110] sm:$0xf]
    %v1847 = vld [vmem:[#allocation3 + $0x16c] sm:$0xf]
    %v1848 = vld [vmem:[#allocation3 + $0x1c8] sm:$0xf]
    %v1849 = vld [vmem:[#allocation3 + $0x224] sm:$0xf]
    %v1850 = vld [vmem:[#allocation3 + $0x280] sm:$0xf]
    %v1851 = vld [vmem:[#allocation3 + $0x2dc] sm:$0xf]
    %v1852 = vld [vmem:[#allocation3 + $0x338] sm:$0xf]
    %v1853 = vld [vmem:[#allocation3 + $0x394] sm:$0xf]
    %v1854 = vld [vmem:[#allocation3 + $0x3f0] sm:$0xf]
    %v1855 = vld [vmem:[#allocation3 + $0x44c] sm:$0xf]
    %v1856 = vld [vmem:[#allocation3 + $0x4a8] sm:$0xf]
    %v1857 = vld [vmem:[#allocation3 + $0x504] sm:$0xf]
    %v1858 = vld [vmem:[#allocation3 + $0x560] sm:$0xf]
    %v1859 = vld [vmem:[#allocation3 + $0x5bc] sm:$0xf]
    %v1860 = vld [vmem:[%s5 + $0x1e] sm:$0x1]
    %v1861 = vperm.slane %v1860, 0
    %v1878 = vunpack.c.l.b16 %v1844
    %v1879 = vunpack.c.l.b16 %v1845
    %v1880 = vunpack.c.l.b16 %v1846
    %v1881 = vunpack.c.l.b16 %v1847
    %v1882 = vunpack.c.l.b16 %v1848
    %v1883 = vunpack.c.l.b16 %v1849
    %v1884 = vunpack.c.l.b16 %v1850
    %v1885 = vunpack.c.l.b16 %v1851
    %v1886 = vunpack.c.l.b16 %v1852
    %v1887 = vunpack.c.l.b16 %v1853
    %v1888 = vunpack.c.l.b16 %v1854
    %v1889 = vunpack.c.l.b16 %v1855
    %v1890 = vunpack.c.l.b16 %v1856
    %v1891 = vunpack.c.l.b16 %v1857
    %v1892 = vunpack.c.l.b16 %v1858
    %v1893 = vunpack.c.l.b16 %v1859
    %v1894 = vpack.c.b16 %v1879, %v1878
    %v1895 = vpack.c.b16 %v1881, %v1880
    %v1896 = vpack.c.b16 %v1883, %v1882
    %v1897 = vpack.c.b16 %v1885, %v1884
    %v1898 = vpack.c.b16 %v1887, %v1886
    %v1899 = vpack.c.b16 %v1889, %v1888
    %v1900 = vpack.c.b16 %v1891, %v1890
    %v1901 = vpack.c.b16 %v1893, %v1892
    %1910 = vmatpush.bf16.msra.mxu0 %v1901
    %1911 = vmatpush.bf16.msra.mxu0 %v1900
    %1912 = vmatpush.bf16.msra.mxu0 %v1899
    %1913 = vmatpush.bf16.msra.mxu0 %v1898
    %1914 = vmatpush.bf16.msra.mxu0 %v1897
    %1915 = vmatpush.bf16.msra.mxu0 %v1896
    %1916 = vmatpush.bf16.msra.mxu0 %v1895
    %1917 = vmatpush.bf16.msra.mxu0 %v1894
    %1918 = vmatmul.bf16.gmra.mxu0 %v1843
    %v1919 = vpop.f32.mrf.mxu0
    %v1920 = vadd.f32 %v1861, %v1919
    %v1921 = vpop.f32.mrf.mxu0
    %1922 = vdwg.mxu0
    %v1923 = vld [vmem:[%s5 + $0x1b] sm:$0x1]
    %v1924 = vld [vmem:[%s5 + $0x1c] sm:$0x1]
    %v1925 = vmul.f32 %v1920, %v48
    %v1926 = vrot.slane %v1925, 4
    %v1927 = vadd.f32 %v1925, %v1926
    %v1928 = vrot.slane %v1927, 2
    %v1929 = vadd.f32 %v1927, %v1928
    %v1930 = vrot.slane %v1929, 1
    %v1931 = vadd.f32 %v1929, %v1930
    %v1932 = vmul.f32 %v1931, %v76
    %v1933 = vsub.f32 %v1920, %v1932
    %v1934 = vmul.f32 %v1933, %v48
    %v1935 = vmul.f32 %v1934, %v1934
    %v1936 = vrot.slane %v1935, 4
    %v1937 = vadd.f32 %v1935, %v1936
    %v1938 = vrot.slane %v1937, 2
    %v1939 = vadd.f32 %v1937, %v1938
    %v1940 = vrot.slane %v1939, 1
    %v1941 = vadd.f32 %v1939, %v1940
    %v1942 = vmul.f32 %v1941, %v76
    %v1943 = vadd.f32 %v1942, 1e-05
    %v1944 = vrsqrt.pop %v1943
    %v1945 = vmul.f32 %v1944, %v1943
    %v1946 = vmul.f32 %v1945, %v1944
    %v1947 = vmul.f32 0.5, %v1946
    %v1948 = vsub.f32 1.5, %v1947
    %v1949 = vmul.f32 %v1944, %v1948
    %vm1950 = vweird.f32 %v1943
    %vm1951 = vweird.f32 %v1944
    %vm1952 = vmor %vm1950, %vm1951
    %v1953 = vsel %vm1952, %v1944, %v1949
    %v1954 = vmul.f32 %v1923, %v1953
    %v1955 = vmul.f32 %v1932, %v1954
    %v1956 = vsub.f32 %v1924, %v1955
    %v1957 = vperm.slane %v1954, 0
    %v1958 = vmul.f32 %v1920, %v1957
    %v1959 = vperm.slane %v1956, 0
    %v1960 = vadd.f32 %v1958, %v1959
    %vm1961 = vcmp.ge.f32.partialorder %v1801, 0.0
    %v1962 = vmul.f32 %v1801, 0.2
    %v1963 = vsel %vm1961, %v1801, %v1962
    %v1964 = vadd.f32 %v1963, %v1960
    %vm1965 = vcmp.ge.f32.partialorder %v1964, 0.0
    %v1966 = vmul.f32 %v1964, 0.2
    %v1967 = vsel %vm1965, %v1964, %v1966
    %v1968 = vpack.c.bf16 %v1967, %v1967
    %v1969 = vld [vmem:[#allocation3 + $0x48] sm:$0xf]
    %v1970 = vld [vmem:[#allocation3 + $0xa4] sm:$0xf]
    %v1971 = vld [vmem:[#allocation3 + $0x100] sm:$0xf]
    %v1972 = vld [vmem:[#allocation3 + $0x15c] sm:$0xf]
    %v1973 = vld [vmem:[#allocation3 + $0x1b8] sm:$0xf]
    %v1974 = vld [vmem:[#allocation3 + $0x214] sm:$0xf]
    %v1975 = vld [vmem:[#allocation3 + $0x270] sm:$0xf]
    %v1976 = vld [vmem:[#allocation3 + $0x2cc] sm:$0xf]
    %v1977 = vld [vmem:[#allocation3 + $0x328] sm:$0xf]
    %v1978 = vld [vmem:[#allocation3 + $0x384] sm:$0xf]
    %v1979 = vld [vmem:[#allocation3 + $0x3e0] sm:$0xf]
    %v1980 = vld [vmem:[#allocation3 + $0x43c] sm:$0xf]
    %v1981 = vld [vmem:[#allocation3 + $0x498] sm:$0xf]
    %v1982 = vld [vmem:[#allocation3 + $0x4f4] sm:$0xf]
    %v1983 = vld [vmem:[#allocation3 + $0x550] sm:$0xf]
    %v1984 = vld [vmem:[#allocation3 + $0x5ac] sm:$0xf]
    %v1985 = vld [vmem:[%s5 + $0x22] sm:$0x1]
    %v1986 = vperm.slane %v1985, 0
    %v2003 = vunpack.c.l.b16 %v1969
    %v2004 = vunpack.c.l.b16 %v1970
    %v2005 = vunpack.c.l.b16 %v1971
    %v2006 = vunpack.c.l.b16 %v1972
    %v2007 = vunpack.c.l.b16 %v1973
    %v2008 = vunpack.c.l.b16 %v1974
    %v2009 = vunpack.c.l.b16 %v1975
    %v2010 = vunpack.c.l.b16 %v1976
    %v2011 = vunpack.c.l.b16 %v1977
    %v2012 = vunpack.c.l.b16 %v1978
    %v2013 = vunpack.c.l.b16 %v1979
    %v2014 = vunpack.c.l.b16 %v1980
    %v2015 = vunpack.c.l.b16 %v1981
    %v2016 = vunpack.c.l.b16 %v1982
    %v2017 = vunpack.c.l.b16 %v1983
    %v2018 = vunpack.c.l.b16 %v1984
    %v2019 = vpack.c.b16 %v2004, %v2003
    %v2020 = vpack.c.b16 %v2006, %v2005
    %v2021 = vpack.c.b16 %v2008, %v2007
    %v2022 = vpack.c.b16 %v2010, %v2009
    %v2023 = vpack.c.b16 %v2012, %v2011
    %v2024 = vpack.c.b16 %v2014, %v2013
    %v2025 = vpack.c.b16 %v2016, %v2015
    %v2026 = vpack.c.b16 %v2018, %v2017
    %2035 = vmatpush.bf16.msra.mxu0 %v2026
    %2036 = vmatpush.bf16.msra.mxu0 %v2025
    %2037 = vmatpush.bf16.msra.mxu0 %v2024
    %2038 = vmatpush.bf16.msra.mxu0 %v2023
    %2039 = vmatpush.bf16.msra.mxu0 %v2022
    %2040 = vmatpush.bf16.msra.mxu0 %v2021
    %2041 = vmatpush.bf16.msra.mxu0 %v2020
    %2042 = vmatpush.bf16.msra.mxu0 %v2019
    %2043 = vmatmul.bf16.gmra.mxu0 %v1968
    %v2044 = vpop.f32.mrf.mxu0
    %v2045 = vadd.f32 %v1986, %v2044
    %v2046 = vpop.f32.mrf.mxu0
    %2047 = vdwg.mxu0
    %2048 = vst [vmem:[%s6] sm:$0xff] %v945
    %2049 = vst [vmem:[%s6 + $0x8] sm:$0xff] %v962
    %2050 = vst [vmem:[%s6 + $0x10] sm:$0xff] %v965
    %2051 = vst [vmem:[%s7] sm:$0xff] %v2045
    // Predicated region
    $region30: #{coarse_net_forward.1} parent=1 // pred_check
      _
    $region31: #{coarse_net_forward.1} parent=1 // pred_check_branch
      %2053 = sbr.rel (0) target = $region33
    $region32: #{coarse_net_forward.1} parent=1 // pred_region
      _
    $region33: #{coarse_net_forward.1} parent=1 // pred_fallthru
      _
    // Predicated region
    $region34: #{coarse_net_forward.1} parent=1 // pred_check
      _
    $region35: #{coarse_net_forward.1} parent=1 // pred_check_branch
      %2055 = sbr.rel (0) target = $region37
    $region36: #{coarse_net_forward.1} parent=1 // pred_region
      _
    $region37: #{coarse_net_forward.1} parent=1 // pred_fallthru
      _
    // Predicated region
    $region38: #{coarse_net_forward.1} parent=1 // pred_check
      _
    $region39: #{coarse_net_forward.1} parent=1 // pred_check_branch
      %2057 = sbr.rel (0) target = $region41
    $region40: #{coarse_net_forward.1} parent=1 // pred_region
      _
    $region41: #{coarse_net_forward.1} parent=1 // pred_fallthru
      _
    // Predicated region
    $region42: #{coarse_net_forward.1} parent=1 // pred_check
      _
    $region43: #{coarse_net_forward.1} parent=1 // pred_check_branch
      %2059 = sbr.rel (0) target = $region45
    $region44: #{coarse_net_forward.1} parent=1 // pred_region
      _
    $region45: #{coarse_net_forward.1} parent=1 // pred_fallthru
      _
    %2060 = vsyncpa [#allocation4], 1

</llo_original>
